<compile_context>
chip_gen: v7x
topology: tpu7x:2x2x1
jax: 0.10.0
libtpu: 0.0.40
codegen_flags: <defaults>
</compile_context>

<pallas_src>
import functools

import jax
import jax.numpy as jnp
from jax.experimental import pallas as pl
from jax.experimental.pallas import tpu as pltpu


def encoder_cnn_kernel(x_cols_ref, w1_ref, b1_ref, w2_ref, b2_ref, w3_ref, b3_ref,
                       out_ref, buf1_ref, buf2_ref, *, L, P, Bt):
    # Flat "stride-P" layout: row r = b*P + j, where j is the *padded* position of
    # sample b (j=0 is the left zero pad, j=1..len_k hold layer-k data, the rest 0).
    # Each conv is then one (M, K*Cin) @ (K*Cin, C) matmul over all samples at once;
    # rows whose j is outside the layer's valid range are masked back to 0 so they act
    # as the next layer's zero padding (valid rows never read across sample blocks).
    C = out_ref.shape[1]
    M = Bt * P
    len1, len2, len3 = L, L - 1, L - 3  # conv output lengths (k=3,4,5; padding=1)

    pos = jax.lax.broadcasted_iota(jnp.int32, (M, C), 0) % P
    mask1 = jnp.logical_and(pos >= 1, pos <= len1)
    mask2 = jnp.logical_and(pos >= 1, pos <= len2)
    mask3 = jnp.logical_and(pos >= 1, pos <= len3)

    # Zero only the guard rows of the scratch buffers (rows 1..M are written below).
    buf1_ref[0:1, :] = jnp.zeros((1, C), jnp.float32)
    buf2_ref[0:1, :] = jnp.zeros((1, C), jnp.float32)
    buf1_ref[M + 1:M + 8, :] = jnp.zeros((7, C), jnp.float32)
    buf2_ref[M + 1:M + 8, :] = jnp.zeros((7, C), jnp.float32)

    # ---- conv1 (im2col prebuilt in the wrapper): one matmul, bias + ReLU + mask ----
    a1 = jnp.dot(x_cols_ref[...], w1_ref[...], preferred_element_type=jnp.float32)
    h1 = jnp.where(mask1, jnp.maximum(a1 + b1_ref[...], 0.0), 0.0)          # (M, C) f32
    buf1_ref[1:M + 1, :] = h1                                               # stored once

    # ---- conv2: im2col = lane-concat of 4 shifted windows -> one matmul ----
    p1 = buf1_ref[...]                                                      # (M+8, C)
    cols2 = jnp.concatenate([p1[t:t + M, :] for t in range(4)], axis=1)     # (M, 4C)
    a2 = jnp.dot(cols2.astype(jnp.bfloat16), w2_ref[...],
                 preferred_element_type=jnp.float32)
    h2 = jnp.where(mask2, jnp.maximum(a2 + b2_ref[...], 0.0), 0.0)
    buf2_ref[1:M + 1, :] = h2

    # ---- conv3: lane-concat of 5 shifted windows -> one matmul ----
    p2 = buf2_ref[...]
    cols3 = jnp.concatenate([p2[t:t + M, :] for t in range(5)], axis=1)     # (M, 5C)
    a3 = jnp.dot(cols3.astype(jnp.bfloat16), w3_ref[...],
                 preferred_element_type=jnp.float32)
    h3 = jnp.where(mask3, jnp.maximum(a3 + b3_ref[...], 0.0), 0.0)

    # ---- global max-pool over time (invalid rows are exactly 0, ReLU >= 0) ----
    for b in range(Bt):
        blk = h3[b * P:(b + 1) * P, :]                  # P is a multiple of 8 (aligned)
        out_ref[b:b + 1, :] = jnp.max(blk, axis=0, keepdims=True)


def encoder_cnn_forward(words, params):
    """words: (B, L) int32; returns (B, out_channels) float32."""
    emb_tbl = params["embedding"]          # (vocab, E)
    w1, b1 = params["w1"], params["b1"]    # (3, E, C), (1, C)
    w2, b2 = params["w2"], params["b2"]    # (4, C, C), (1, C)
    w3, b3 = params["w3"], params["b3"]    # (5, C, C), (1, C)

    B, L = words.shape
    assert L >= 4, "conv3 output length L-3 must be >= 1"
    E = emb_tbl.shape[1]
    C = w1.shape[2]

    P = ((L + 2 + 7) // 8) * 8             # per-sample row stride, sublane aligned
    BT = max(1, min(B, 16))                # samples per grid step (BT*L fills the MXU M dim)
    n_tiles = -(-B // BT)
    B_pad = n_tiles * BT
    M = BT * P

    # ---- glue (plain JAX): embedding lookup, dropout(p=0)==identity, conv1 im2col ----
    words_p = jnp.pad(words, ((0, B_pad - B), (0, 0)))
    emb = emb_tbl[words_p].astype(jnp.bfloat16)                           # (B_pad, L, E)
    xpad = jnp.pad(emb, ((0, 0), (1, 1), (0, 0)))                         # (B_pad, L+2, E)
    cols1 = jnp.concatenate([xpad[:, t:t + L, :] for t in range(3)], axis=-1)  # (B_pad, L, 3E)
    x_cols = jnp.zeros((B_pad, P, 3 * E), jnp.bfloat16)
    x_cols = x_cols.at[:, 1:L + 1, :].set(cols1).reshape(B_pad * P, 3 * E)

    w1r = w1.reshape(3 * E, C).astype(jnp.bfloat16)
    w2r = w2.reshape(4 * C, C).astype(jnp.bfloat16)
    w3r = w3.reshape(5 * C, C).astype(jnp.bfloat16)
    b1f = b1.astype(jnp.float32)
    b2f = b2.astype(jnp.float32)
    b3f = b3.astype(jnp.float32)

    kernel = functools.partial(encoder_cnn_kernel, L=L, P=P, Bt=BT)

    out = pl.pallas_call(
        kernel,
        out_shape=jax.ShapeDtypeStruct((B_pad, C), jnp.float32),
        grid_spec=pltpu.PrefetchScalarGridSpec(
            num_scalar_prefetch=0,
            grid=(n_tiles,),
            in_specs=[
                pl.BlockSpec((M, 3 * E), lambda g: (g, 0)),   # conv1 im2col rows (bf16)
                pl.BlockSpec((3 * E, C), lambda g: (0, 0)),   # w1 (bf16)
                pl.BlockSpec((1, C),     lambda g: (0, 0)),   # b1 (f32)
                pl.BlockSpec((4 * C, C), lambda g: (0, 0)),   # w2 (bf16)
                pl.BlockSpec((1, C),     lambda g: (0, 0)),   # b2 (f32)
                pl.BlockSpec((5 * C, C), lambda g: (0, 0)),   # w3 (bf16)
                pl.BlockSpec((1, C),     lambda g: (0, 0)),   # b3 (f32)
            ],
            out_specs=pl.BlockSpec((BT, C), lambda g: (g, 0)),
            scratch_shapes=[
                pltpu.VMEM((M + 8, C), jnp.float32),   # padded layer-1 activations
                pltpu.VMEM((M + 8, C), jnp.float32),   # padded layer-2 activations
            ],
        ),
        compiler_params=pltpu.CompilerParams(
            dimension_semantics=("parallel",),          # independent batch tiles (v7x: 2 TCs)
            vmem_limit_bytes=32 * 1024 * 1024,
        ),
    )(x_cols, w1r, b1f, w2r, b2f, w3r, b3f)
    return out[:B]


def reference_forward(words, params, compute_dtype=jnp.float32):
    """Pure-JAX reference. compute_dtype=bf16 mirrors the kernel's mixed precision."""
    emb = params["embedding"][words]                     # (B, L, E) f32

    def conv1d(x, w, b, pad):                            # x: (B, Lin, Cin), w: (K, Cin, Cout)
        K = w.shape[0]
        xc = x.astype(compute_dtype)
        wc = w.astype(compute_dtype)
        xp = jnp.pad(xc, ((0, 0), (pad, pad), (0, 0)))
        Lout = xp.shape[1] - K + 1
        acc = jnp.zeros((x.shape[0], Lout, w.shape[2]), jnp.float32)
        for t in range(K):
            acc = acc + jnp.einsum("ble,ec->blc", xp[:, t:t + Lout, :], wc[t],
                                   preferred_element_type=jnp.float32)
        return jnp.maximum(acc + b[None, :, :], 0.0)

    o1 = conv1d(emb, params["w1"], params["b1"], 1)
    o2 = conv1d(o1, params["w2"], params["b2"], 1)
    o3 = conv1d(o2, params["w3"], params["b3"], 1)
    return jnp.max(o3, axis=1)                           # (B, C)


def init_params(key, vocab_size, embedding_size, out_channels):
    ks = jax.random.split(key, 7)
    scale = 0.05
    E, C = embedding_size, out_channels
    return {
        "embedding": scale * jax.random.normal(ks[0], (vocab_size, E), jnp.float32),
        "w1": scale * jax.random.normal(ks[1], (3, E, C), jnp.float32),
        "b1": scale * jax.random.normal(ks[2], (1, C), jnp.float32),
        "w2": scale * jax.random.normal(ks[3], (4, C, C), jnp.float32),
        "b2": scale * jax.random.normal(ks[4], (1, C), jnp.float32),
        "w3": scale * jax.random.normal(ks[5], (5, C, C), jnp.float32),
        "b3": scale * jax.random.normal(ks[6], (1, C), jnp.float32),
    }


if __name__ == "__main__":
    vocab_size = 50
    embedding_size = 32
    out_channels = 128
    B, L = 2, 16

    key = jax.random.PRNGKey(0)
    pkey, wkey = jax.random.split(key)
    params = init_params(pkey, vocab_size, embedding_size, out_channels)
    words = jax.random.randint(wkey, (B, L), 0, vocab_size, dtype=jnp.int32)

    out = encoder_cnn_forward(words, params)
    out = jax.block_until_ready(out)
    assert out.shape == (B, out_channels)

    # Tight check vs a reference that matches the kernel's mixed precision
    # (bf16 matmul inputs, f32 accumulation).
    ref_mixed = reference_forward(words, params, compute_dtype=jnp.bfloat16)
    assert jnp.allclose(out, ref_mixed, atol=1e-4, rtol=1e-4), "mismatch vs mixed-precision ref"

    # Looser check vs the full-f32 reference (difference = bf16 input rounding only).
    ref_f32 = reference_forward(words, params)
    assert jnp.allclose(out, ref_f32, atol=5e-3, rtol=5e-2), "mismatch vs f32 reference"

    print("KERNEL_OK")
</pallas_src>

<mosaic_0001>
module attributes {stable_mosaic.version = 11 : i64} {
  func.func @encoder_cnn_kernel(%arg0: i32, %arg1: memref<48x96xbf16, #tpu.memory_space<vmem>>, %arg2: memref<96x128xbf16, #tpu.memory_space<vmem>>, %arg3: memref<1x128xf32, #tpu.memory_space<vmem>>, %arg4: memref<512x128xbf16, #tpu.memory_space<vmem>>, %arg5: memref<1x128xf32, #tpu.memory_space<vmem>>, %arg6: memref<640x128xbf16, #tpu.memory_space<vmem>>, %arg7: memref<1x128xf32, #tpu.memory_space<vmem>>, %arg8: memref<2x128xf32, #tpu.memory_space<vmem>>, %arg9: memref<56x128xf32, #tpu.memory_space<vmem>>, %arg10: memref<56x128xf32, #tpu.memory_space<vmem>>) attributes {dimension_semantics = [#tpu.dimension_semantics<parallel>], iteration_bounds = array<i64: 1>, scalar_prefetch = 0 : i64, scratch_operands = 2 : i64, tpu.core_type = #tpu.core_type<tc>, window_params = [{transform_indices = @transform_0, window_bounds = array<i64: 48, 96>}, {pipeline_mode = #tpu.pipeline_mode<synchronous>, transform_indices = @transform_1, window_bounds = array<i64: 96, 128>}, {pipeline_mode = #tpu.pipeline_mode<synchronous>, transform_indices = @transform_2, window_bounds = array<i64: 1, 128>}, {pipeline_mode = #tpu.pipeline_mode<synchronous>, transform_indices = @transform_3, window_bounds = array<i64: 512, 128>}, {pipeline_mode = #tpu.pipeline_mode<synchronous>, transform_indices = @transform_4, window_bounds = array<i64: 1, 128>}, {pipeline_mode = #tpu.pipeline_mode<synchronous>, transform_indices = @transform_5, window_bounds = array<i64: 640, 128>}, {pipeline_mode = #tpu.pipeline_mode<synchronous>, transform_indices = @transform_6, window_bounds = array<i64: 1, 128>}, {transform_indices = @transform_7, window_bounds = array<i64: 2, 128>}]} {
    %0 = tpu.iota {dimensions = array<i32: 0>} : vector<48x128xi32>
    %c24_i32 = arith.constant 24 : i32
    %c0_i32 = arith.constant 0 : i32
    %1 = arith.cmpi eq, %c24_i32, %c0_i32 : i32
    %c1_i32 = arith.constant 1 : i32
    %2 = arith.select %1, %c1_i32, %c24_i32 : i32
    %3 = vector.broadcast %2 : i32 to vector<48x128xi32>
    %4 = arith.remsi %0, %3 : vector<48x128xi32>
    %c0_i32_0 = arith.constant 0 : i32
    %5 = vector.broadcast %c0_i32_0 : i32 to vector<48x128xi32>
    %6 = arith.cmpi ne, %4, %5 : vector<48x128xi32>
    %c0_i32_1 = arith.constant 0 : i32
    %7 = vector.broadcast %c0_i32_1 : i32 to vector<48x128xi32>
    %8 = arith.cmpi slt, %4, %7 : vector<48x128xi32>
    %c0_i32_2 = arith.constant 0 : i32
    %9 = arith.cmpi slt, %2, %c0_i32_2 : i32
    %10 = vector.broadcast %9 : i1 to vector<48x128xi1>
    %11 = vector.broadcast %10 : vector<48x128xi1> to vector<48x128xi1>
    %12 = arith.xori %8, %11 : vector<48x128xi1>
    %13 = arith.andi %12, %6 : vector<48x128xi1>
    %14 = vector.broadcast %2 : i32 to vector<48x128xi32>
    %15 = arith.addi %4, %14 : vector<48x128xi32>
    %16 = arith.select %13, %15, %4 : vector<48x128xi1>, vector<48x128xi32>
    %c1_i32_3 = arith.constant 1 : i32
    %17 = vector.broadcast %c1_i32_3 : i32 to vector<48x128xi32>
    %18 = arith.cmpi sge, %16, %17 : vector<48x128xi32>
    %c16_i32 = arith.constant 16 : i32
    %19 = vector.broadcast %c16_i32 : i32 to vector<48x128xi32>
    %20 = arith.cmpi sle, %16, %19 : vector<48x128xi32>
    %21 = arith.andi %18, %20 : vector<48x128xi1>
    %c1_i32_4 = arith.constant 1 : i32
    %22 = vector.broadcast %c1_i32_4 : i32 to vector<48x128xi32>
    %23 = arith.cmpi sge, %16, %22 : vector<48x128xi32>
    %c15_i32 = arith.constant 15 : i32
    %24 = vector.broadcast %c15_i32 : i32 to vector<48x128xi32>
    %25 = arith.cmpi sle, %16, %24 : vector<48x128xi32>
    %26 = arith.andi %23, %25 : vector<48x128xi1>
    %c1_i32_5 = arith.constant 1 : i32
    %27 = vector.broadcast %c1_i32_5 : i32 to vector<48x128xi32>
    %28 = arith.cmpi sge, %16, %27 : vector<48x128xi32>
    %c13_i32 = arith.constant 13 : i32
    %29 = vector.broadcast %c13_i32 : i32 to vector<48x128xi32>
    %30 = arith.cmpi sle, %16, %29 : vector<48x128xi32>
    %31 = arith.andi %28, %30 : vector<48x128xi1>
    %cst = arith.constant 0.000000e+00 : f32
    %32 = vector.broadcast %cst : f32 to vector<1x128xf32>
    %c0 = arith.constant 0 : index
    %c0_6 = arith.constant 0 : index
    %33 = vector.load %arg9[%c0, %c0_6] : memref<56x128xf32, #tpu.memory_space<vmem>>, vector<1x128xf32>
    tpu.vector_store %arg9[%c0, %c0_6], %32 {strides = array<i32>} : memref<56x128xf32, #tpu.memory_space<vmem>>, vector<1x128xf32>,
    %cst_7 = arith.constant 0.000000e+00 : f32
    %34 = vector.broadcast %cst_7 : f32 to vector<1x128xf32>
    %c0_8 = arith.constant 0 : index
    %c0_9 = arith.constant 0 : index
    %35 = vector.load %arg10[%c0_8, %c0_9] : memref<56x128xf32, #tpu.memory_space<vmem>>, vector<1x128xf32>
    tpu.vector_store %arg10[%c0_8, %c0_9], %34 {strides = array<i32>} : memref<56x128xf32, #tpu.memory_space<vmem>>, vector<1x128xf32>,
    %cst_10 = arith.constant 0.000000e+00 : f32
    %36 = vector.broadcast %cst_10 : f32 to vector<7x128xf32>
    %c49 = arith.constant 49 : index
    %c0_11 = arith.constant 0 : index
    %37 = vector.load %arg9[%c49, %c0_11] : memref<56x128xf32, #tpu.memory_space<vmem>>, vector<7x128xf32>
    tpu.vector_store %arg9[%c49, %c0_11], %36 {strides = array<i32>} : memref<56x128xf32, #tpu.memory_space<vmem>>, vector<7x128xf32>,
    %cst_12 = arith.constant 0.000000e+00 : f32
    %38 = vector.broadcast %cst_12 : f32 to vector<7x128xf32>
    %c49_13 = arith.constant 49 : index
    %c0_14 = arith.constant 0 : index
    %39 = vector.load %arg10[%c49_13, %c0_14] : memref<56x128xf32, #tpu.memory_space<vmem>>, vector<7x128xf32>
    tpu.vector_store %arg10[%c49_13, %c0_14], %38 {strides = array<i32>} : memref<56x128xf32, #tpu.memory_space<vmem>>, vector<7x128xf32>,
    %c0_15 = arith.constant 0 : index
    %c0_16 = arith.constant 0 : index
    %40 = vector.load %arg1[%c0_15, %c0_16] : memref<48x96xbf16, #tpu.memory_space<vmem>>, vector<48x96xbf16>
    %c0_17 = arith.constant 0 : index
    %c0_18 = arith.constant 0 : index
    %41 = vector.load %arg2[%c0_17, %c0_18] : memref<96x128xbf16, #tpu.memory_space<vmem>>, vector<96x128xbf16>
    %cst_19 = arith.constant dense<0.000000e+00> : vector<48x128xf32>
    %42 = tpu.matmul %40, %41, %cst_19 {dimension_numbers = #tpu.dot_dimension_numbers<[1], [0], [0], [1], [0, 0, 1, 1], [], []>} : vector<48x96xbf16>, vector<96x128xbf16>, vector<48x128xf32> -> vector<48x128xf32>
    %c0_20 = arith.constant 0 : index
    %c0_21 = arith.constant 0 : index
    %43 = vector.load %arg3[%c0_20, %c0_21] : memref<1x128xf32, #tpu.memory_space<vmem>>, vector<1x128xf32>
    %44 = vector.broadcast %43 : vector<1x128xf32> to vector<48x128xf32>
    %45 = arith.addf %42, %44 : vector<48x128xf32>
    %cst_22 = arith.constant 0.000000e+00 : f32
    %46 = vector.broadcast %cst_22 : f32 to vector<48x128xf32>
    %47 = arith.maximumf %45, %46 : vector<48x128xf32>
    %cst_23 = arith.constant 0.000000e+00 : f32
    %48 = vector.broadcast %cst_23 : f32 to vector<48x128xf32>
    %49 = arith.select %21, %47, %48 : vector<48x128xi1>, vector<48x128xf32>
    %c1 = arith.constant 1 : index
    %c0_24 = arith.constant 0 : index
    %50 = vector.load %arg9[%c1, %c0_24] : memref<56x128xf32, #tpu.memory_space<vmem>>, vector<48x128xf32>
    tpu.vector_store %arg9[%c1, %c0_24], %49 {strides = array<i32>} : memref<56x128xf32, #tpu.memory_space<vmem>>, vector<48x128xf32>,
    %c0_25 = arith.constant 0 : index
    %c0_26 = arith.constant 0 : index
    %51 = vector.load %arg9[%c0_25, %c0_26] : memref<56x128xf32, #tpu.memory_space<vmem>>, vector<56x128xf32>
    %52 = vector.extract_strided_slice %51 {offsets = [0, 0], sizes = [48, 128], strides = [1, 1]} : vector<56x128xf32> to vector<48x128xf32>
    %53 = vector.extract_strided_slice %51 {offsets = [1, 0], sizes = [48, 128], strides = [1, 1]} : vector<56x128xf32> to vector<48x128xf32>
    %54 = vector.extract_strided_slice %51 {offsets = [2, 0], sizes = [48, 128], strides = [1, 1]} : vector<56x128xf32> to vector<48x128xf32>
    %55 = vector.extract_strided_slice %51 {offsets = [3, 0], sizes = [48, 128], strides = [1, 1]} : vector<56x128xf32> to vector<48x128xf32>
    %56 = tpu.concatenate %52, %53, %54, %55 in 1 : vector<48x128xf32>, vector<48x128xf32>, vector<48x128xf32>, vector<48x128xf32> -> vector<48x512xf32>
    %57 = arith.truncf %56 : vector<48x512xf32> to vector<48x512xbf16>
    %c0_27 = arith.constant 0 : index
    %c0_28 = arith.constant 0 : index
    %58 = vector.load %arg4[%c0_27, %c0_28] : memref<512x128xbf16, #tpu.memory_space<vmem>>, vector<512x128xbf16>
    %cst_29 = arith.constant dense<0.000000e+00> : vector<48x128xf32>
    %59 = tpu.matmul %57, %58, %cst_29 {dimension_numbers = #tpu.dot_dimension_numbers<[1], [0], [0], [1], [0, 0, 1, 1], [], []>} : vector<48x512xbf16>, vector<512x128xbf16>, vector<48x128xf32> -> vector<48x128xf32>
    %c0_30 = arith.constant 0 : index
    %c0_31 = arith.constant 0 : index
    %60 = vector.load %arg5[%c0_30, %c0_31] : memref<1x128xf32, #tpu.memory_space<vmem>>, vector<1x128xf32>
    %61 = vector.broadcast %60 : vector<1x128xf32> to vector<48x128xf32>
    %62 = arith.addf %59, %61 : vector<48x128xf32>
    %cst_32 = arith.constant 0.000000e+00 : f32
    %63 = vector.broadcast %cst_32 : f32 to vector<48x128xf32>
    %64 = arith.maximumf %62, %63 : vector<48x128xf32>
    %cst_33 = arith.constant 0.000000e+00 : f32
    %65 = vector.broadcast %cst_33 : f32 to vector<48x128xf32>
    %66 = arith.select %26, %64, %65 : vector<48x128xi1>, vector<48x128xf32>
    %c1_34 = arith.constant 1 : index
    %c0_35 = arith.constant 0 : index
    %67 = vector.load %arg10[%c1_34, %c0_35] : memref<56x128xf32, #tpu.memory_space<vmem>>, vector<48x128xf32>
    tpu.vector_store %arg10[%c1_34, %c0_35], %66 {strides = array<i32>} : memref<56x128xf32, #tpu.memory_space<vmem>>, vector<48x128xf32>,
    %c0_36 = arith.constant 0 : index
    %c0_37 = arith.constant 0 : index
    %68 = vector.load %arg10[%c0_36, %c0_37] : memref<56x128xf32, #tpu.memory_space<vmem>>, vector<56x128xf32>
    %69 = vector.extract_strided_slice %68 {offsets = [0, 0], sizes = [48, 128], strides = [1, 1]} : vector<56x128xf32> to vector<48x128xf32>
    %70 = vector.extract_strided_slice %68 {offsets = [1, 0], sizes = [48, 128], strides = [1, 1]} : vector<56x128xf32> to vector<48x128xf32>
    %71 = vector.extract_strided_slice %68 {offsets = [2, 0], sizes = [48, 128], strides = [1, 1]} : vector<56x128xf32> to vector<48x128xf32>
    %72 = vector.extract_strided_slice %68 {offsets = [3, 0], sizes = [48, 128], strides = [1, 1]} : vector<56x128xf32> to vector<48x128xf32>
    %73 = vector.extract_strided_slice %68 {offsets = [4, 0], sizes = [48, 128], strides = [1, 1]} : vector<56x128xf32> to vector<48x128xf32>
    %74 = tpu.concatenate %69, %70, %71, %72, %73 in 1 : vector<48x128xf32>, vector<48x128xf32>, vector<48x128xf32>, vector<48x128xf32>, vector<48x128xf32> -> vector<48x640xf32>
    %75 = arith.truncf %74 : vector<48x640xf32> to vector<48x640xbf16>
    %c0_38 = arith.constant 0 : index
    %c0_39 = arith.constant 0 : index
    %76 = vector.load %arg6[%c0_38, %c0_39] : memref<640x128xbf16, #tpu.memory_space<vmem>>, vector<640x128xbf16>
    %cst_40 = arith.constant dense<0.000000e+00> : vector<48x128xf32>
    %77 = tpu.matmul %75, %76, %cst_40 {dimension_numbers = #tpu.dot_dimension_numbers<[1], [0], [0], [1], [0, 0, 1, 1], [], []>} : vector<48x640xbf16>, vector<640x128xbf16>, vector<48x128xf32> -> vector<48x128xf32>
    %c0_41 = arith.constant 0 : index
    %c0_42 = arith.constant 0 : index
    %78 = vector.load %arg7[%c0_41, %c0_42] : memref<1x128xf32, #tpu.memory_space<vmem>>, vector<1x128xf32>
    %79 = vector.broadcast %78 : vector<1x128xf32> to vector<48x128xf32>
    %80 = arith.addf %77, %79 : vector<48x128xf32>
    %cst_43 = arith.constant 0.000000e+00 : f32
    %81 = vector.broadcast %cst_43 : f32 to vector<48x128xf32>
    %82 = arith.maximumf %80, %81 : vector<48x128xf32>
    %cst_44 = arith.constant 0.000000e+00 : f32
    %83 = vector.broadcast %cst_44 : f32 to vector<48x128xf32>
    %84 = arith.select %31, %82, %83 : vector<48x128xi1>, vector<48x128xf32>
    %85 = vector.extract_strided_slice %84 {offsets = [0, 0], sizes = [24, 128], strides = [1, 1]} : vector<48x128xf32> to vector<24x128xf32>
    %cst_45 = arith.constant dense<0xFF800000> : vector<128xf32>
    %86 = vector.multi_reduction <maximumf>, %85, %cst_45 [0] : vector<24x128xf32> to vector<128xf32>
    %87 = vector.shape_cast %86 : vector<128xf32> to vector<1x128xf32>
    %c0_46 = arith.constant 0 : index
    %c0_47 = arith.constant 0 : index
    %88 = vector.load %arg8[%c0_46, %c0_47] : memref<2x128xf32, #tpu.memory_space<vmem>>, vector<1x128xf32>
    tpu.vector_store %arg8[%c0_46, %c0_47], %87 {strides = array<i32>} : memref<2x128xf32, #tpu.memory_space<vmem>>, vector<1x128xf32>,
    %89 = vector.extract_strided_slice %84 {offsets = [24, 0], sizes = [24, 128], strides = [1, 1]} : vector<48x128xf32> to vector<24x128xf32>
    %cst_48 = arith.constant dense<0xFF800000> : vector<128xf32>
    %90 = vector.multi_reduction <maximumf>, %89, %cst_48 [0] : vector<24x128xf32> to vector<128xf32>
    %91 = vector.shape_cast %90 : vector<128xf32> to vector<1x128xf32>
    %c1_49 = arith.constant 1 : index
    %c0_50 = arith.constant 0 : index
    %92 = vector.load %arg8[%c1_49, %c0_50] : memref<2x128xf32, #tpu.memory_space<vmem>>, vector<1x128xf32>
    tpu.vector_store %arg8[%c1_49, %c0_50], %91 {strides = array<i32>} : memref<2x128xf32, #tpu.memory_space<vmem>>, vector<1x128xf32>,
    return
  }
  func.func @transform_0(%arg0: i32) -> (i32, i32) {
    %c0_i32 = arith.constant 0 : i32
    %c0_i32_0 = arith.constant 0 : i32
    return %arg0, %c0_i32 : i32, i32
  }
  func.func @transform_1(%arg0: i32) -> (i32, i32) {
    %c0_i32 = arith.constant 0 : i32
    %c0_i32_0 = arith.constant 0 : i32
    %c0_i32_1 = arith.constant 0 : i32
    return %c0_i32, %c0_i32_0 : i32, i32
  }
  func.func @transform_2(%arg0: i32) -> (i32, i32) {
    %c0_i32 = arith.constant 0 : i32
    %c0_i32_0 = arith.constant 0 : i32
    %c0_i32_1 = arith.constant 0 : i32
    return %c0_i32, %c0_i32_0 : i32, i32
  }
  func.func @transform_3(%arg0: i32) -> (i32, i32) {
    %c0_i32 = arith.constant 0 : i32
    %c0_i32_0 = arith.constant 0 : i32
    %c0_i32_1 = arith.constant 0 : i32
    return %c0_i32, %c0_i32_0 : i32, i32
  }
  func.func @transform_4(%arg0: i32) -> (i32, i32) {
    %c0_i32 = arith.constant 0 : i32
    %c0_i32_0 = arith.constant 0 : i32
    %c0_i32_1 = arith.constant 0 : i32
    return %c0_i32, %c0_i32_0 : i32, i32
  }
  func.func @transform_5(%arg0: i32) -> (i32, i32) {
    %c0_i32 = arith.constant 0 : i32
    %c0_i32_0 = arith.constant 0 : i32
    %c0_i32_1 = arith.constant 0 : i32
    return %c0_i32, %c0_i32_0 : i32, i32
  }
  func.func @transform_6(%arg0: i32) -> (i32, i32) {
    %c0_i32 = arith.constant 0 : i32
    %c0_i32_0 = arith.constant 0 : i32
    %c0_i32_1 = arith.constant 0 : i32
    return %c0_i32, %c0_i32_0 : i32, i32
  }
  func.func @transform_7(%arg0: i32) -> (i32, i32) {
    %c0_i32 = arith.constant 0 : i32
    %c0_i32_0 = arith.constant 0 : i32
    return %arg0, %c0_i32 : i32, i32
  }
}

</mosaic_0001>

<llo_original>
// kernel: tpu_custom_call.1
$region0: #{tpu_custom_call.1}
  #allocation0 [shape = 'u32[]', space=smem, size = 0x4, offset = 0x4, fixed_abs, tag = 'smem constant byte address 0x4 - core index']
  #allocation1 [shape = 'u32[144,128]{1,0:T(1,128)}', space=vmem, size = 0x12000, scoped, tag = 'internal scratch']
  #allocation2 [shape = 'f32[56,128]{1,0:T(8,128)}', space=vmem, size = 0x7000, scoped, tag = 'scratch operand']
  #allocation3 [shape = 'f32[56,128]{1,0:T(8,128)}', space=vmem, size = 0x7000, scoped, tag = 'scratch operand']
  %s0 = inlined_call_operand.hbm [shape: bf16[48,96], index: 0, kind: input, shape index: {}]
  %s1 = inlined_call_operand.hbm [shape: bf16[96,128], index: 1, kind: input, shape index: {}]
  %s2 = inlined_call_operand.vmem [shape: f32[1,128], index: 2, kind: input, shape index: {}]
  %s3 = inlined_call_operand.hbm [shape: bf16[512,128], index: 3, kind: input, shape index: {}]
  %s4 = inlined_call_operand.vmem [shape: f32[1,128], index: 4, kind: input, shape index: {}]
  %s5 = inlined_call_operand.hbm [shape: bf16[640,128], index: 5, kind: input, shape index: {}]
  %s6 = inlined_call_operand.vmem [shape: f32[1,128], index: 6, kind: input, shape index: {}]
  %s7 = inlined_call_operand.hbm [shape: f32[2,128], index: 7, kind: output, shape index: {}]
  %s8 = sld [smem:[#allocation0]]
  $region54: #{tpu_custom_call.1} parent=0
    _
  %s10 = ssub.s32 1, %s8
  %s11 = scalar_select 0, %s10, %s8
  $region1: #{tpu_custom_call.1} parent=0
    #allocation4 [shape = 'u8[12288]{0}', space=vmem, size = 0x3000, scoped, tag = 'input window, operand 0, single buffered']
    #allocation5 [shape = 's32[1]{0}', space=sflag, size = 0x4, scoped, tag = 'scoped memory for tpu_custom_call.1']
    #allocation6 [shape = 's32[1]{0}', space=sflag, size = 0x4, scoped, tag = 'scoped memory for tpu_custom_call.1']
    #allocation7 [shape = 'u8[24576]{0}', space=vmem, size = 0x6000, scoped, tag = 'input window, operand 1, single buffered']
    #allocation8 [shape = 's32[1]{0}', space=sflag, size = 0x4, scoped, tag = 'scoped memory for tpu_custom_call.1']
    #allocation9 [shape = 'u8[131072]{0}', space=vmem, size = 0x20000, scoped, tag = 'input window, operand 3, single buffered']
    #allocation10 [shape = 'u8[163840]{0}', space=vmem, size = 0x28000, scoped, tag = 'input window, operand 5, single buffered']
    #allocation11 [shape = 's32[1]{0}', space=sflag, size = 0x4, scoped, tag = 'scoped memory for tpu_custom_call.1']
    #allocation12 [shape = 'u8[1024]{0}', space=vmem, size = 0x400, scoped, tag = 'output window, operand 0, single buffered']
    %12 = vsyncpa [#allocation5], 0
    %13 = vsyncpa [#allocation8], 0
    %14 = vsyncpa [#allocation11], 0
    %15 = vsyncpa [#allocation6], 0
    // Predicated region
    $region2: #{tpu_custom_call.1} parent=1 // pred_check
      _
    $region3: #{tpu_custom_call.1} parent=1 // pred_check_branch
      %17 = sbr.rel (0) target = $region5
    $region4: #{tpu_custom_call.1} parent=1 // pred_region
      %s19 = ssub.s32 384, 384
      %20 = vsyncadd [#allocation5], %s19
      %s21 = sshll.u32 [#allocation4], 4
      %s22 = int_to_ptr.vmem [resolvable:$true] %s21
      %27 = dma.hbm_to_vmem [thread:$0]  %s0, 384, %s22, [#allocation5], 64, 64, 4
    $region5: #{tpu_custom_call.1} parent=1 // pred_fallthru
      _
    // Predicated region
    $region6: #{tpu_custom_call.1} parent=1 // pred_check
      _
    $region7: #{tpu_custom_call.1} parent=1 // pred_check_branch
      %29 = sbr.rel (0) target = $region9
    $region8: #{tpu_custom_call.1} parent=1 // pred_region
      %s31 = ssub.s32 768, 768
      %32 = vsyncadd [#allocation8], %s31
      %s33 = sshll.u32 [#allocation7], 4
      %s34 = int_to_ptr.vmem [resolvable:$true] %s33
      %39 = dma.hbm_to_vmem [thread:$0]  %s1, 768, %s34, [#allocation8], 64, 64, 4
    $region9: #{tpu_custom_call.1} parent=1 // pred_fallthru
      _
    // Predicated region
    $region10: #{tpu_custom_call.1} parent=1 // pred_check
      _
    $region11: #{tpu_custom_call.1} parent=1 // pred_check_branch
      %41 = sbr.rel (0) target = $region13
    $region12: #{tpu_custom_call.1} parent=1 // pred_region
      _
    $region13: #{tpu_custom_call.1} parent=1 // pred_fallthru
      _
    // Predicated region
    $region14: #{tpu_custom_call.1} parent=1 // pred_check
      _
    $region15: #{tpu_custom_call.1} parent=1 // pred_check_branch
      %43 = sbr.rel (0) target = $region17
    $region16: #{tpu_custom_call.1} parent=1 // pred_region
      %s45 = ssub.s32 4096, 4096
      %46 = vsyncadd [#allocation8], %s45
      %s47 = sshll.u32 [#allocation9], 4
      %s48 = int_to_ptr.vmem [resolvable:$true] %s47
      %53 = dma.hbm_to_vmem [thread:$0]  %s3, 4096, %s48, [#allocation8], 64, 64, 4
    $region17: #{tpu_custom_call.1} parent=1 // pred_fallthru
      _
    // Predicated region
    $region18: #{tpu_custom_call.1} parent=1 // pred_check
      _
    $region19: #{tpu_custom_call.1} parent=1 // pred_check_branch
      %55 = sbr.rel (0) target = $region21
    $region20: #{tpu_custom_call.1} parent=1 // pred_region
      _
    $region21: #{tpu_custom_call.1} parent=1 // pred_fallthru
      _
    // Predicated region
    $region22: #{tpu_custom_call.1} parent=1 // pred_check
      _
    $region23: #{tpu_custom_call.1} parent=1 // pred_check_branch
      %57 = sbr.rel (0) target = $region25
    $region24: #{tpu_custom_call.1} parent=1 // pred_region
      %s59 = ssub.s32 5120, 5120
      %60 = vsyncadd [#allocation11], %s59
      %s61 = sshll.u32 [#allocation10], 4
      %s62 = int_to_ptr.vmem [resolvable:$true] %s61
      %67 = dma.hbm_to_vmem [thread:$0]  %s5, 5120, %s62, [#allocation11], 64, 64, 4
    $region25: #{tpu_custom_call.1} parent=1 // pred_fallthru
      _
    // Predicated region
    $region26: #{tpu_custom_call.1} parent=1 // pred_check
      _
    $region27: #{tpu_custom_call.1} parent=1 // pred_check_branch
      %69 = sbr.rel (0) target = $region29
    $region28: #{tpu_custom_call.1} parent=1 // pred_region
      _
    $region29: #{tpu_custom_call.1} parent=1 // pred_fallthru
      _
    // Predicated region
    $region30: #{tpu_custom_call.1} parent=1 // pred_check
      _
    $region31: #{tpu_custom_call.1} parent=1 // pred_check_branch
      %71 = sbr.rel (0) target = $region33
    $region32: #{tpu_custom_call.1} parent=1 // pred_region
      %72 = dma.done [#allocation5], 384
    $region33: #{tpu_custom_call.1} parent=1 // pred_fallthru
      _
    // Predicated region
    $region34: #{tpu_custom_call.1} parent=1 // pred_check
      _
    $region35: #{tpu_custom_call.1} parent=1 // pred_check_branch
      %74 = sbr.rel (0) target = $region37
    $region36: #{tpu_custom_call.1} parent=1 // pred_region
      %75 = dma.done [#allocation8], 768
    $region37: #{tpu_custom_call.1} parent=1 // pred_fallthru
      _
    // Predicated region
    $region38: #{tpu_custom_call.1} parent=1 // pred_check
      _
    $region39: #{tpu_custom_call.1} parent=1 // pred_check_branch
      %77 = sbr.rel (0) target = $region41
    $region40: #{tpu_custom_call.1} parent=1 // pred_region
      %78 = dma.done [#allocation8], 4096
    $region41: #{tpu_custom_call.1} parent=1 // pred_fallthru
      _
    // Predicated region
    $region42: #{tpu_custom_call.1} parent=1 // pred_check
      _
    $region43: #{tpu_custom_call.1} parent=1 // pred_check_branch
      %80 = sbr.rel (0) target = $region45
    $region44: #{tpu_custom_call.1} parent=1 // pred_region
      %81 = dma.done [#allocation11], 5120
    $region45: #{tpu_custom_call.1} parent=1 // pred_fallthru
      _
    %v83 = vlaneseq
    %v84 = vshrl.u32 %v83, 7
    %v85 = vadd.s32 %v84, 8
    %v86 = vadd.s32 %v84, 16
    %v87 = vadd.s32 %v84, 24
    %v88 = vadd.s32 %v84, 32
    %v89 = vadd.s32 %v84, 40
    %vm90 = vcmp.lt.s32.totalorder %v84, 0
    %v91 = vsub.s32 0, %v84
    %v92 = vsel %vm90, %v91, %v84
    %v93 = vmul.u32.u64.compose %v92, 2863311531
    %v94 = vextract.low.u32 %v93
    %v95 = vextract.high.u32 %v93
    %v96 = vshrl.u32 %v95, 4
    %v97 = vmul.u32 %v96, 24
    %v98 = vsub.s32 %v92, %v97
    %v99 = vsub.s32 0, %v98
    %v100 = vsel %vm90, %v99, %v98
    %vm101 = vcmp.lt.s32.totalorder %v85, 0
    %v102 = vsub.s32 0, %v85
    %v103 = vsel %vm101, %v102, %v85
    %v104 = vmul.u32.u64.compose %v103, 2863311531
    %v105 = vextract.low.u32 %v104
    %v106 = vextract.high.u32 %v104
    %v107 = vshrl.u32 %v106, 4
    %v108 = vmul.u32 %v107, 24
    %v109 = vsub.s32 %v103, %v108
    %v110 = vsub.s32 0, %v109
    %v111 = vsel %vm101, %v110, %v109
    %vm112 = vcmp.lt.s32.totalorder %v86, 0
    %v113 = vsub.s32 0, %v86
    %v114 = vsel %vm112, %v113, %v86
    %v115 = vmul.u32.u64.compose %v114, 2863311531
    %v116 = vextract.low.u32 %v115
    %v117 = vextract.high.u32 %v115
    %v118 = vshrl.u32 %v117, 4
    %v119 = vmul.u32 %v118, 24
    %v120 = vsub.s32 %v114, %v119
    %v121 = vsub.s32 0, %v120
    %v122 = vsel %vm112, %v121, %v120
    %vm123 = vcmp.lt.s32.totalorder %v87, 0
    %v124 = vsub.s32 0, %v87
    %v125 = vsel %vm123, %v124, %v87
    %v126 = vmul.u32.u64.compose %v125, 2863311531
    %v127 = vextract.low.u32 %v126
    %v128 = vextract.high.u32 %v126
    %v129 = vshrl.u32 %v128, 4
    %v130 = vmul.u32 %v129, 24
    %v131 = vsub.s32 %v125, %v130
    %v132 = vsub.s32 0, %v131
    %v133 = vsel %vm123, %v132, %v131
    %vm134 = vcmp.lt.s32.totalorder %v88, 0
    %v135 = vsub.s32 0, %v88
    %v136 = vsel %vm134, %v135, %v88
    %v137 = vmul.u32.u64.compose %v136, 2863311531
    %v138 = vextract.low.u32 %v137
    %v139 = vextract.high.u32 %v137
    %v140 = vshrl.u32 %v139, 4
    %v141 = vmul.u32 %v140, 24
    %v142 = vsub.s32 %v136, %v141
    %v143 = vsub.s32 0, %v142
    %v144 = vsel %vm134, %v143, %v142
    %vm145 = vcmp.lt.s32.totalorder %v89, 0
    %v146 = vsub.s32 0, %v89
    %v147 = vsel %vm145, %v146, %v89
    %v148 = vmul.u32.u64.compose %v147, 2863311531
    %v149 = vextract.low.u32 %v148
    %v150 = vextract.high.u32 %v148
    %v151 = vshrl.u32 %v150, 4
    %v152 = vmul.u32 %v151, 24
    %v153 = vsub.s32 %v147, %v152
    %v154 = vsub.s32 0, %v153
    %v155 = vsel %vm145, %v154, %v153
    %vm156 = vcmp.ne.s32.totalorder %v100, 0
    %vm157 = vcmp.ne.s32.totalorder %v111, 0
    %vm158 = vcmp.ne.s32.totalorder %v122, 0
    %vm159 = vcmp.ne.s32.totalorder %v133, 0
    %vm160 = vcmp.ne.s32.totalorder %v144, 0
    %vm161 = vcmp.ne.s32.totalorder %v155, 0
    %vm162 = vcmp.lt.s32.totalorder %v100, 0
    %vm163 = vcmp.lt.s32.totalorder %v111, 0
    %vm164 = vcmp.lt.s32.totalorder %v122, 0
    %vm165 = vcmp.lt.s32.totalorder %v133, 0
    %vm166 = vcmp.lt.s32.totalorder %v144, 0
    %vm167 = vcmp.lt.s32.totalorder %v155, 0
    %vm168 = vmand %vm162, %vm156
    %vm169 = vmand %vm163, %vm157
    %vm170 = vmand %vm164, %vm158
    %vm171 = vmand %vm165, %vm159
    %vm172 = vmand %vm166, %vm160
    %vm173 = vmand %vm167, %vm161
    %v174 = vadd.s32 %v100, 24
    %v175 = vadd.s32 %v111, 24
    %v176 = vadd.s32 %v122, 24
    %v177 = vadd.s32 %v133, 24
    %v178 = vadd.s32 %v144, 24
    %v179 = vadd.s32 %v155, 24
    %v180 = vsel %vm168, %v174, %v100
    %v181 = vsel %vm169, %v175, %v111
    %v182 = vsel %vm170, %v176, %v122
    %v183 = vsel %vm171, %v177, %v133
    %v184 = vsel %vm172, %v178, %v144
    %v185 = vsel %vm173, %v179, %v155
    %vm186 = vcmp.ge.s32.totalorder %v180, 1
    %vm187 = vcmp.ge.s32.totalorder %v181, 1
    %vm188 = vcmp.ge.s32.totalorder %v182, 1
    %vm189 = vcmp.ge.s32.totalorder %v183, 1
    %vm190 = vcmp.ge.s32.totalorder %v184, 1
    %vm191 = vcmp.ge.s32.totalorder %v185, 1
    %vm192 = vcmp.le.s32.totalorder %v180, 16
    %vm193 = vcmp.le.s32.totalorder %v181, 16
    %vm194 = vcmp.le.s32.totalorder %v182, 16
    %vm195 = vcmp.le.s32.totalorder %v183, 16
    %vm196 = vcmp.le.s32.totalorder %v184, 16
    %vm197 = vcmp.le.s32.totalorder %v185, 16
    %vm198 = vmand %vm186, %vm192
    %vm199 = vmand %vm187, %vm193
    %vm200 = vmand %vm188, %vm194
    %vm201 = vmand %vm189, %vm195
    %vm202 = vmand %vm190, %vm196
    %vm203 = vmand %vm191, %vm197
    %vm204 = vcmp.le.s32.totalorder %v180, 15
    %vm205 = vcmp.le.s32.totalorder %v181, 15
    %vm206 = vcmp.le.s32.totalorder %v182, 15
    %vm207 = vcmp.le.s32.totalorder %v183, 15
    %vm208 = vcmp.le.s32.totalorder %v184, 15
    %vm209 = vcmp.le.s32.totalorder %v185, 15
    %vm210 = vmand %vm186, %vm204
    %vm211 = vmand %vm187, %vm205
    %vm212 = vmand %vm188, %vm206
    %vm213 = vmand %vm189, %vm207
    %vm214 = vmand %vm190, %vm208
    %vm215 = vmand %vm191, %vm209
    %vm216 = vcmp.le.s32.totalorder %v180, 13
    %vm217 = vcmp.le.s32.totalorder %v181, 13
    %vm218 = vcmp.le.s32.totalorder %v182, 13
    %vm219 = vcmp.le.s32.totalorder %v183, 13
    %vm220 = vcmp.le.s32.totalorder %v184, 13
    %vm221 = vcmp.le.s32.totalorder %v185, 13
    %vm222 = vmand %vm186, %vm216
    %vm223 = vmand %vm187, %vm217
    %vm224 = vmand %vm188, %vm218
    %vm225 = vmand %vm189, %vm219
    %vm226 = vmand %vm190, %vm220
    %vm227 = vmand %vm191, %vm221
    %228 = vst [vmem:[#allocation2] sm:$0x1] 0.0
    %229 = vst [vmem:[#allocation3] sm:$0x1] 0.0
    %230 = vst [vmem:[#allocation2 + $0x31] sm:$0x7f] 0.0
    %231 = vst [vmem:[#allocation3 + $0x31] sm:$0x7f] 0.0
    %v232 = vld [vmem:[#allocation4] sm:$0xf]
    %v233 = vld [vmem:[#allocation4 + $0x4] sm:$0xf]
    %v234 = vld [vmem:[#allocation4 + $0x8] sm:$0xf]
    %v235 = vld [vmem:[#allocation4 + $0xc] sm:$0xf]
    %v236 = vld [vmem:[#allocation4 + $0x10] sm:$0xf]
    %v237 = vld [vmem:[#allocation4 + $0x14] sm:$0xf]
    %v238 = vld [vmem:[#allocation7] sm:$0xf]
    %v239 = vld [vmem:[#allocation7 + $0x4] sm:$0xf]
    %v240 = vld [vmem:[#allocation7 + $0x8] sm:$0xf]
    %v241 = vld [vmem:[#allocation7 + $0xc] sm:$0xf]
    %v242 = vld [vmem:[#allocation7 + $0x10] sm:$0xf]
    %v243 = vld [vmem:[#allocation7 + $0x14] sm:$0xf]
    %v244 = vld [vmem:[#allocation7 + $0x18] sm:$0xf]
    %v245 = vld [vmem:[#allocation7 + $0x1c] sm:$0xf]
    %v246 = vld [vmem:[#allocation7 + $0x20] sm:$0xf]
    %v247 = vld [vmem:[#allocation7 + $0x24] sm:$0xf]
    %v248 = vld [vmem:[#allocation7 + $0x28] sm:$0xf]
    %v249 = vld [vmem:[#allocation7 + $0x2c] sm:$0xf]
    %v250 = vld [vmem:[%s2] sm:$0x1]
    %v252 = vlaneseq
    %v253 = vshrl.u32 %v252, 7
    %v254 = vsub.s32 0, %v253
    %v255 = vrot.slane %v250, %v254
    %v263 = vunpack.c.l.b16 %v232
    %v264 = vunpack.c.l.b16 %v233
    %v265 = vunpack.c.l.b16 %v234
    %v266 = vunpack.c.l.b16 %v235
    %v267 = vunpack.c.l.b16 %v236
    %v268 = vunpack.c.l.b16 %v237
    %v269 = vpack.c.b16 %v264, %v263
    %v270 = vpack.c.b16 %v266, %v265
    %v271 = vpack.c.b16 %v268, %v267
    %v284 = vunpack.c.l.b16 %v238
    %v285 = vunpack.c.l.b16 %v239
    %v286 = vunpack.c.l.b16 %v240
    %v287 = vunpack.c.l.b16 %v241
    %v288 = vunpack.c.l.b16 %v242
    %v289 = vunpack.c.l.b16 %v243
    %v290 = vunpack.c.l.b16 %v244
    %v291 = vunpack.c.l.b16 %v245
    %v292 = vunpack.c.l.b16 %v246
    %v293 = vunpack.c.l.b16 %v247
    %v294 = vunpack.c.l.b16 %v248
    %v295 = vunpack.c.l.b16 %v249
    %v296 = vpack.c.b16 %v285, %v284
    %v297 = vpack.c.b16 %v287, %v286
    %v298 = vpack.c.b16 %v289, %v288
    %v299 = vpack.c.b16 %v291, %v290
    %v300 = vpack.c.b16 %v293, %v292
    %v301 = vpack.c.b16 %v295, %v294
    %vm308 = vcmask 785408
    %v310 = vsel %vm308, %v269, 0
    %v313 = vsel %vm308, %v270, 0
    %v316 = vsel %vm308, %v271, 0
    %318 = vmatprep.subr.bf16.mxu0 0
    %319 = vmatpush1.bf16.msra.mxu0 %v296
    %320 = vmatprep.subr.bf16.mxu0 0
    %321 = vmatpush1.bf16.msra.mxu0 %v297
    %322 = vmatprep.subr.bf16.mxu0 0
    %323 = vmatpush1.bf16.msra.mxu0 %v298
    %324 = vmatprep.subr.bf16.mxu0 0
    %325 = vmatpush1.bf16.msra.mxu0 %v299
    %326 = vmatprep.subr.bf16.mxu0 0
    %327 = vmatpush1.bf16.msra.mxu0 %v300
    %328 = vmatprep.subr.bf16.mxu0 0
    %329 = vmatpush1.bf16.msra.mxu0 %v301
    %330 = vmatprep.subr.bf16.mxu0 0
    %331 = vmatpush1.bf16.msra.mxu0 0
    %332 = vmatprep.subr.bf16.mxu0 0
    %333 = vmatpush1.bf16.msra.mxu0 0
    %334 = vmatprep.subr.bf16.mxu0 0
    %335 = vmatpush1.bf16.msra.mxu0 0
    %336 = vmatprep.subr.bf16.mxu0 0
    %337 = vmatpush1.bf16.msra.mxu0 0
    %338 = vmatprep.subr.bf16.mxu0 0
    %339 = vmatpush1.bf16.msra.mxu0 0
    %340 = vmatprep.subr.bf16.mxu0 0
    %341 = vmatpush1.bf16.msra.mxu0 0
    %342 = vmatprep.subr.bf16.mxu0 0
    %343 = vmatpush1.bf16.msra.mxu0 0
    %344 = vmatprep.subr.bf16.mxu0 0
    %345 = vmatpush1.bf16.msra.mxu0 0
    %346 = vmatprep.subr.bf16.mxu0 0
    %347 = vmatpush1.bf16.msra.mxu0 0
    %348 = vmatprep.subr.bf16.mxu0 0
    %349 = vmatpush1.bf16.msra.mxu0 0
    %350 = vmatprep.mubr.bf16.mxu0 0
    %351 = vmatmul.mubr.bf16.gmra.mrb[0].mxu0 %v310
    %v352 = vpop.f32.mrb[0].mxu0
    %v353 = vadd.f32 %v255, %v352
    %v354 = vpop.f32.mrb[0].mxu0
    %v355 = vpop.f32.mrb[0].mxu0
    %v356 = vadd.f32 %v255, %v355
    %v357 = vpop.f32.mrb[0].mxu0
    %358 = vmatprep.mubr.bf16.mxu0 0
    %359 = vmatmul.mubr.bf16.gmra.mrb[0].mxu0 %v313
    %v360 = vpop.f32.mrb[0].mxu0
    %v361 = vadd.f32 %v255, %v360
    %v362 = vpop.f32.mrb[0].mxu0
    %v363 = vpop.f32.mrb[0].mxu0
    %v364 = vadd.f32 %v255, %v363
    %v365 = vpop.f32.mrb[0].mxu0
    %366 = vmatprep.mubr.bf16.mxu0 0
    %367 = vmatmul.mubr.bf16.gmra.mrb[0].mxu0 %v316
    %v368 = vpop.f32.mrb[0].mxu0
    %v369 = vadd.f32 %v255, %v368
    %v370 = vpop.f32.mrb[0].mxu0
    %v371 = vpop.f32.mrb[0].mxu0
    %v372 = vadd.f32 %v255, %v371
    %v373 = vpop.f32.mrb[0].mxu0
    %374 = vdwg.mxu0
    %v375 = vmax.f32 %v353, 0.0
    %v376 = vmax.f32 %v356, 0.0
    %v377 = vmax.f32 %v361, 0.0
    %v378 = vmax.f32 %v364, 0.0
    %v379 = vmax.f32 %v369, 0.0
    %v380 = vmax.f32 %v372, 0.0
    %v381 = vsel %vm198, %v375, 0.0
    %v382 = vsel %vm199, %v376, 0.0
    %v383 = vsel %vm200, %v377, 0.0
    %v384 = vsel %vm201, %v378, 0.0
    %v385 = vsel %vm202, %v379, 0.0
    %v386 = vsel %vm203, %v380, 0.0
    %387 = vst [vmem:[#allocation2 + $0x1] sm:$0xff] %v381
    %388 = vst [vmem:[#allocation2 + $0x9] sm:$0xff] %v382
    %389 = vst [vmem:[#allocation2 + $0x11] sm:$0xff] %v383
    %390 = vst [vmem:[#allocation2 + $0x19] sm:$0xff] %v384
    %391 = vst [vmem:[#allocation2 + $0x21] sm:$0xff] %v385
    %392 = vst [vmem:[#allocation2 + $0x29] sm:$0xff] %v386
    %v393 = vld [vmem:[#allocation2] sm:$0xff]
    %v394 = vld [vmem:[#allocation2 + $0x8] sm:$0xff]
    %v395 = vld [vmem:[#allocation2 + $0x10] sm:$0xff]
    %v396 = vld [vmem:[#allocation2 + $0x18] sm:$0xff]
    %v397 = vld [vmem:[#allocation2 + $0x20] sm:$0xff]
    %v398 = vld [vmem:[#allocation2 + $0x28] sm:$0xff]
    %v399 = vld [vmem:[#allocation2 + $0x30] sm:$0xff]
    %vm407 = vcmask 1046528
    %v408 = vrot.slane %v393, 1
    %v409 = vrot.slane %v394, 1
    %v410 = vsel %vm407, %v408, %v409
    %v411 = vrot.slane %v395, 1
    %v412 = vsel %vm407, %v409, %v411
    %v413 = vrot.slane %v396, 1
    %v414 = vsel %vm407, %v411, %v413
    %v415 = vrot.slane %v397, 1
    %v416 = vsel %vm407, %v413, %v415
    %v417 = vrot.slane %v398, 1
    %v418 = vsel %vm407, %v415, %v417
    %v419 = vrot.slane %v399, 1
    %v420 = vsel %vm407, %v417, %v419
    %vm427 = vcmask 1045504
    %v428 = vrot.slane %v393, 2
    %v429 = vrot.slane %v394, 2
    %v430 = vsel %vm427, %v428, %v429
    %v431 = vrot.slane %v395, 2
    %v432 = vsel %vm427, %v429, %v431
    %v433 = vrot.slane %v396, 2
    %v434 = vsel %vm427, %v431, %v433
    %v435 = vrot.slane %v397, 2
    %v436 = vsel %vm427, %v433, %v435
    %v437 = vrot.slane %v398, 2
    %v438 = vsel %vm427, %v435, %v437
    %v439 = vrot.slane %v399, 2
    %v440 = vsel %vm427, %v437, %v439
    %vm447 = vcmask 1044480
    %v448 = vrot.slane %v393, 3
    %v449 = vrot.slane %v394, 3
    %v450 = vsel %vm447, %v448, %v449
    %v451 = vrot.slane %v395, 3
    %v452 = vsel %vm447, %v449, %v451
    %v453 = vrot.slane %v396, 3
    %v454 = vsel %vm447, %v451, %v453
    %v455 = vrot.slane %v397, 3
    %v456 = vsel %vm447, %v453, %v455
    %v457 = vrot.slane %v398, 3
    %v458 = vsel %vm447, %v455, %v457
    %v459 = vrot.slane %v399, 3
    %v460 = vsel %vm447, %v457, %v459
    %v467 = vpack.c.bf16 %v394, %v393
    %v468 = vpack.c.bf16 %v412, %v410
    %v469 = vpack.c.bf16 %v432, %v430
    %v470 = vpack.c.bf16 %v452, %v450
    %v471 = vpack.c.bf16 %v396, %v395
    %v472 = vpack.c.bf16 %v416, %v414
    %v473 = vpack.c.bf16 %v436, %v434
    %v474 = vpack.c.bf16 %v456, %v454
    %v475 = vpack.c.bf16 %v398, %v397
    %v476 = vpack.c.bf16 %v420, %v418
    %v477 = vpack.c.bf16 %v440, %v438
    %v478 = vpack.c.bf16 %v460, %v458
    %v479 = vld [vmem:[#allocation9] sm:$0xf]
    %v480 = vld [vmem:[#allocation9 + $0x4] sm:$0xf]
    %v481 = vld [vmem:[#allocation9 + $0x8] sm:$0xf]
    %v482 = vld [vmem:[#allocation9 + $0xc] sm:$0xf]
    %v483 = vld [vmem:[#allocation9 + $0x10] sm:$0xf]
    %v484 = vld [vmem:[#allocation9 + $0x14] sm:$0xf]
    %v485 = vld [vmem:[#allocation9 + $0x18] sm:$0xf]
    %v486 = vld [vmem:[#allocation9 + $0x1c] sm:$0xf]
    %v487 = vld [vmem:[#allocation9 + $0x20] sm:$0xf]
    %v488 = vld [vmem:[#allocation9 + $0x24] sm:$0xf]
    %v489 = vld [vmem:[#allocation9 + $0x28] sm:$0xf]
    %v490 = vld [vmem:[#allocation9 + $0x2c] sm:$0xf]
    %v491 = vld [vmem:[#allocation9 + $0x30] sm:$0xf]
    %v492 = vld [vmem:[#allocation9 + $0x34] sm:$0xf]
    %v493 = vld [vmem:[#allocation9 + $0x38] sm:$0xf]
    %v494 = vld [vmem:[#allocation9 + $0x3c] sm:$0xf]
    %v495 = vld [vmem:[#allocation9 + $0x40] sm:$0xf]
    %v496 = vld [vmem:[#allocation9 + $0x44] sm:$0xf]
    %v497 = vld [vmem:[#allocation9 + $0x48] sm:$0xf]
    %v498 = vld [vmem:[#allocation9 + $0x4c] sm:$0xf]
    %v499 = vld [vmem:[#allocation9 + $0x50] sm:$0xf]
    %v500 = vld [vmem:[#allocation9 + $0x54] sm:$0xf]
    %v501 = vld [vmem:[#allocation9 + $0x58] sm:$0xf]
    %v502 = vld [vmem:[#allocation9 + $0x5c] sm:$0xf]
    %v503 = vld [vmem:[#allocation9 + $0x60] sm:$0xf]
    %v504 = vld [vmem:[#allocation9 + $0x64] sm:$0xf]
    %v505 = vld [vmem:[#allocation9 + $0x68] sm:$0xf]
    %v506 = vld [vmem:[#allocation9 + $0x6c] sm:$0xf]
    %v507 = vld [vmem:[#allocation9 + $0x70] sm:$0xf]
    %v508 = vld [vmem:[#allocation9 + $0x74] sm:$0xf]
    %v509 = vld [vmem:[#allocation9 + $0x78] sm:$0xf]
    %v510 = vld [vmem:[#allocation9 + $0x7c] sm:$0xf]
    %v511 = vld [vmem:[#allocation9 + $0x80] sm:$0xf]
    %v512 = vld [vmem:[#allocation9 + $0x84] sm:$0xf]
    %v513 = vld [vmem:[#allocation9 + $0x88] sm:$0xf]
    %v514 = vld [vmem:[#allocation9 + $0x8c] sm:$0xf]
    %v515 = vld [vmem:[#allocation9 + $0x90] sm:$0xf]
    %v516 = vld [vmem:[#allocation9 + $0x94] sm:$0xf]
    %v517 = vld [vmem:[#allocation9 + $0x98] sm:$0xf]
    %v518 = vld [vmem:[#allocation9 + $0x9c] sm:$0xf]
    %v519 = vld [vmem:[#allocation9 + $0xa0] sm:$0xf]
    %v520 = vld [vmem:[#allocation9 + $0xa4] sm:$0xf]
    %v521 = vld [vmem:[#allocation9 + $0xa8] sm:$0xf]
    %v522 = vld [vmem:[#allocation9 + $0xac] sm:$0xf]
    %v523 = vld [vmem:[#allocation9 + $0xb0] sm:$0xf]
    %v524 = vld [vmem:[#allocation9 + $0xb4] sm:$0xf]
    %v525 = vld [vmem:[#allocation9 + $0xb8] sm:$0xf]
    %v526 = vld [vmem:[#allocation9 + $0xbc] sm:$0xf]
    %v527 = vld [vmem:[#allocation9 + $0xc0] sm:$0xf]
    %v528 = vld [vmem:[#allocation9 + $0xc4] sm:$0xf]
    %v529 = vld [vmem:[#allocation9 + $0xc8] sm:$0xf]
    %v530 = vld [vmem:[#allocation9 + $0xcc] sm:$0xf]
    %v531 = vld [vmem:[#allocation9 + $0xd0] sm:$0xf]
    %v532 = vld [vmem:[#allocation9 + $0xd4] sm:$0xf]
    %v533 = vld [vmem:[#allocation9 + $0xd8] sm:$0xf]
    %v534 = vld [vmem:[#allocation9 + $0xdc] sm:$0xf]
    %v535 = vld [vmem:[#allocation9 + $0xe0] sm:$0xf]
    %v536 = vld [vmem:[#allocation9 + $0xe4] sm:$0xf]
    %v537 = vld [vmem:[#allocation9 + $0xe8] sm:$0xf]
    %v538 = vld [vmem:[#allocation9 + $0xec] sm:$0xf]
    %v539 = vld [vmem:[#allocation9 + $0xf0] sm:$0xf]
    %v540 = vld [vmem:[#allocation9 + $0xf4] sm:$0xf]
    %v541 = vld [vmem:[#allocation9 + $0xf8] sm:$0xf]
    %v542 = vld [vmem:[#allocation9 + $0xfc] sm:$0xf]
    %v543 = vld [vmem:[%s4] sm:$0x1]
    %v545 = vlaneseq
    %v546 = vshrl.u32 %v545, 7
    %v547 = vsub.s32 0, %v546
    %v548 = vrot.slane %v543, %v547
    %v614 = vunpack.c.l.b16 %v479
    %v615 = vunpack.c.l.b16 %v480
    %v616 = vunpack.c.l.b16 %v481
    %v617 = vunpack.c.l.b16 %v482
    %v618 = vunpack.c.l.b16 %v483
    %v619 = vunpack.c.l.b16 %v484
    %v620 = vunpack.c.l.b16 %v485
    %v621 = vunpack.c.l.b16 %v486
    %v622 = vunpack.c.l.b16 %v487
    %v623 = vunpack.c.l.b16 %v488
    %v624 = vunpack.c.l.b16 %v489
    %v625 = vunpack.c.l.b16 %v490
    %v626 = vunpack.c.l.b16 %v491
    %v627 = vunpack.c.l.b16 %v492
    %v628 = vunpack.c.l.b16 %v493
    %v629 = vunpack.c.l.b16 %v494
    %v630 = vunpack.c.l.b16 %v495
    %v631 = vunpack.c.l.b16 %v496
    %v632 = vunpack.c.l.b16 %v497
    %v633 = vunpack.c.l.b16 %v498
    %v634 = vunpack.c.l.b16 %v499
    %v635 = vunpack.c.l.b16 %v500
    %v636 = vunpack.c.l.b16 %v501
    %v637 = vunpack.c.l.b16 %v502
    %v638 = vunpack.c.l.b16 %v503
    %v639 = vunpack.c.l.b16 %v504
    %v640 = vunpack.c.l.b16 %v505
    %v641 = vunpack.c.l.b16 %v506
    %v642 = vunpack.c.l.b16 %v507
    %v643 = vunpack.c.l.b16 %v508
    %v644 = vunpack.c.l.b16 %v509
    %v645 = vunpack.c.l.b16 %v510
    %v646 = vunpack.c.l.b16 %v511
    %v647 = vunpack.c.l.b16 %v512
    %v648 = vunpack.c.l.b16 %v513
    %v649 = vunpack.c.l.b16 %v514
    %v650 = vunpack.c.l.b16 %v515
    %v651 = vunpack.c.l.b16 %v516
    %v652 = vunpack.c.l.b16 %v517
    %v653 = vunpack.c.l.b16 %v518
    %v654 = vunpack.c.l.b16 %v519
    %v655 = vunpack.c.l.b16 %v520
    %v656 = vunpack.c.l.b16 %v521
    %v657 = vunpack.c.l.b16 %v522
    %v658 = vunpack.c.l.b16 %v523
    %v659 = vunpack.c.l.b16 %v524
    %v660 = vunpack.c.l.b16 %v525
    %v661 = vunpack.c.l.b16 %v526
    %v662 = vunpack.c.l.b16 %v527
    %v663 = vunpack.c.l.b16 %v528
    %v664 = vunpack.c.l.b16 %v529
    %v665 = vunpack.c.l.b16 %v530
    %v666 = vunpack.c.l.b16 %v531
    %v667 = vunpack.c.l.b16 %v532
    %v668 = vunpack.c.l.b16 %v533
    %v669 = vunpack.c.l.b16 %v534
    %v670 = vunpack.c.l.b16 %v535
    %v671 = vunpack.c.l.b16 %v536
    %v672 = vunpack.c.l.b16 %v537
    %v673 = vunpack.c.l.b16 %v538
    %v674 = vunpack.c.l.b16 %v539
    %v675 = vunpack.c.l.b16 %v540
    %v676 = vunpack.c.l.b16 %v541
    %v677 = vunpack.c.l.b16 %v542
    %v678 = vpack.c.b16 %v615, %v614
    %v679 = vpack.c.b16 %v617, %v616
    %v680 = vpack.c.b16 %v619, %v618
    %v681 = vpack.c.b16 %v621, %v620
    %v682 = vpack.c.b16 %v623, %v622
    %v683 = vpack.c.b16 %v625, %v624
    %v684 = vpack.c.b16 %v627, %v626
    %v685 = vpack.c.b16 %v629, %v628
    %v686 = vpack.c.b16 %v631, %v630
    %v687 = vpack.c.b16 %v633, %v632
    %v688 = vpack.c.b16 %v635, %v634
    %v689 = vpack.c.b16 %v637, %v636
    %v690 = vpack.c.b16 %v639, %v638
    %v691 = vpack.c.b16 %v641, %v640
    %v692 = vpack.c.b16 %v643, %v642
    %v693 = vpack.c.b16 %v645, %v644
    %v694 = vpack.c.b16 %v647, %v646
    %v695 = vpack.c.b16 %v649, %v648
    %v696 = vpack.c.b16 %v651, %v650
    %v697 = vpack.c.b16 %v653, %v652
    %v698 = vpack.c.b16 %v655, %v654
    %v699 = vpack.c.b16 %v657, %v656
    %v700 = vpack.c.b16 %v659, %v658
    %v701 = vpack.c.b16 %v661, %v660
    %v702 = vpack.c.b16 %v663, %v662
    %v703 = vpack.c.b16 %v665, %v664
    %v704 = vpack.c.b16 %v667, %v666
    %v705 = vpack.c.b16 %v669, %v668
    %v706 = vpack.c.b16 %v671, %v670
    %v707 = vpack.c.b16 %v673, %v672
    %v708 = vpack.c.b16 %v675, %v674
    %v709 = vpack.c.b16 %v677, %v676
    %742 = vmatprep.subr.bf16.mxu0 0
    %743 = vmatpush1.bf16.msra.mxu0 %v678
    %744 = vmatprep.subr.bf16.mxu0 0
    %745 = vmatpush1.bf16.msra.mxu0 %v679
    %746 = vmatprep.subr.bf16.mxu0 0
    %747 = vmatpush1.bf16.msra.mxu0 %v680
    %748 = vmatprep.subr.bf16.mxu0 0
    %749 = vmatpush1.bf16.msra.mxu0 %v681
    %750 = vmatprep.subr.bf16.mxu0 0
    %751 = vmatpush1.bf16.msra.mxu0 %v682
    %752 = vmatprep.subr.bf16.mxu0 0
    %753 = vmatpush1.bf16.msra.mxu0 %v683
    %754 = vmatprep.subr.bf16.mxu0 0
    %755 = vmatpush1.bf16.msra.mxu0 %v684
    %756 = vmatprep.subr.bf16.mxu0 0
    %757 = vmatpush1.bf16.msra.mxu0 %v685
    %758 = vmatprep.subr.bf16.mxu0 0
    %759 = vmatpush1.bf16.msra.mxu0 %v686
    %760 = vmatprep.subr.bf16.mxu0 0
    %761 = vmatpush1.bf16.msra.mxu0 %v687
    %762 = vmatprep.subr.bf16.mxu0 0
    %763 = vmatpush1.bf16.msra.mxu0 %v688
    %764 = vmatprep.subr.bf16.mxu0 0
    %765 = vmatpush1.bf16.msra.mxu0 %v689
    %766 = vmatprep.subr.bf16.mxu0 0
    %767 = vmatpush1.bf16.msra.mxu0 %v690
    %768 = vmatprep.subr.bf16.mxu0 0
    %769 = vmatpush1.bf16.msra.mxu0 %v691
    %770 = vmatprep.subr.bf16.mxu0 0
    %771 = vmatpush1.bf16.msra.mxu0 %v692
    %772 = vmatprep.subr.bf16.mxu0 0
    %773 = vmatpush1.bf16.msra.mxu0 %v693
    %774 = vmatprep.mubr.bf16.mxu0 %v468
    %775 = vmatmul.mubr.bf16.gmra.mrb[0].mxu0 %v467
    %v776 = vpop.f32.mrb[0].mxu0
    %v777 = vadd.f32 %v548, %v776
    %v778 = vpop.f32.mrb[0].mxu0
    %v779 = vpop.f32.mrb[0].mxu0
    %v780 = vadd.f32 %v548, %v779
    %v781 = vpop.f32.mrb[0].mxu0
    %782 = vmatprep.mubr.bf16.mxu0 %v472
    %783 = vmatmul.mubr.bf16.gmra.mrb[0].mxu0 %v471
    %v784 = vpop.f32.mrb[0].mxu0
    %v785 = vadd.f32 %v548, %v784
    %v786 = vpop.f32.mrb[0].mxu0
    %v787 = vpop.f32.mrb[0].mxu0
    %v788 = vadd.f32 %v548, %v787
    %v789 = vpop.f32.mrb[0].mxu0
    %790 = vmatprep.mubr.bf16.mxu0 %v476
    %791 = vmatmul.mubr.bf16.gmra.mrb[0].mxu0 %v475
    %v792 = vpop.f32.mrb[0].mxu0
    %v793 = vadd.f32 %v548, %v792
    %v794 = vpop.f32.mrb[0].mxu0
    %v795 = vpop.f32.mrb[0].mxu0
    %v796 = vadd.f32 %v548, %v795
    %v797 = vpop.f32.mrb[0].mxu0
    %798 = vdwg.mxu0
    %799 = vmatprep.subr.bf16.mxu0 0
    %800 = vmatpush1.bf16.msra.mxu0 %v694
    %801 = vmatprep.subr.bf16.mxu0 0
    %802 = vmatpush1.bf16.msra.mxu0 %v695
    %803 = vmatprep.subr.bf16.mxu0 0
    %804 = vmatpush1.bf16.msra.mxu0 %v696
    %805 = vmatprep.subr.bf16.mxu0 0
    %806 = vmatpush1.bf16.msra.mxu0 %v697
    %807 = vmatprep.subr.bf16.mxu0 0
    %808 = vmatpush1.bf16.msra.mxu0 %v698
    %809 = vmatprep.subr.bf16.mxu0 0
    %810 = vmatpush1.bf16.msra.mxu0 %v699
    %811 = vmatprep.subr.bf16.mxu0 0
    %812 = vmatpush1.bf16.msra.mxu0 %v700
    %813 = vmatprep.subr.bf16.mxu0 0
    %814 = vmatpush1.bf16.msra.mxu0 %v701
    %815 = vmatprep.subr.bf16.mxu0 0
    %816 = vmatpush1.bf16.msra.mxu0 %v702
    %817 = vmatprep.subr.bf16.mxu0 0
    %818 = vmatpush1.bf16.msra.mxu0 %v703
    %819 = vmatprep.subr.bf16.mxu0 0
    %820 = vmatpush1.bf16.msra.mxu0 %v704
    %821 = vmatprep.subr.bf16.mxu0 0
    %822 = vmatpush1.bf16.msra.mxu0 %v705
    %823 = vmatprep.subr.bf16.mxu0 0
    %824 = vmatpush1.bf16.msra.mxu0 %v706
    %825 = vmatprep.subr.bf16.mxu0 0
    %826 = vmatpush1.bf16.msra.mxu0 %v707
    %827 = vmatprep.subr.bf16.mxu0 0
    %828 = vmatpush1.bf16.msra.mxu0 %v708
    %829 = vmatprep.subr.bf16.mxu0 0
    %830 = vmatpush1.bf16.msra.mxu0 %v709
    %831 = vmatprep.mubr.bf16.mxu0 %v470
    %832 = vmatmul.mubr.bf16.gmra.mrb[0].mxu0 %v469
    %v833 = vpop.f32.mrb[0].mxu0
    %v834 = vadd.f32 %v777, %v833
    %v835 = vpop.f32.mrb[0].mxu0
    %v836 = vpop.f32.mrb[0].mxu0
    %v837 = vadd.f32 %v780, %v836
    %v838 = vpop.f32.mrb[0].mxu0
    %839 = vmatprep.mubr.bf16.mxu0 %v474
    %840 = vmatmul.mubr.bf16.gmra.mrb[0].mxu0 %v473
    %v841 = vpop.f32.mrb[0].mxu0
    %v842 = vadd.f32 %v785, %v841
    %v843 = vpop.f32.mrb[0].mxu0
    %v844 = vpop.f32.mrb[0].mxu0
    %v845 = vadd.f32 %v788, %v844
    %v846 = vpop.f32.mrb[0].mxu0
    %847 = vmatprep.mubr.bf16.mxu0 %v478
    %848 = vmatmul.mubr.bf16.gmra.mrb[0].mxu0 %v477
    %v849 = vpop.f32.mrb[0].mxu0
    %v850 = vadd.f32 %v793, %v849
    %v851 = vpop.f32.mrb[0].mxu0
    %v852 = vpop.f32.mrb[0].mxu0
    %v853 = vadd.f32 %v796, %v852
    %v854 = vpop.f32.mrb[0].mxu0
    %855 = vdwg.mxu0
    %v856 = vmax.f32 %v834, 0.0
    %v857 = vmax.f32 %v837, 0.0
    %v858 = vmax.f32 %v842, 0.0
    %v859 = vmax.f32 %v845, 0.0
    %v860 = vmax.f32 %v850, 0.0
    %v861 = vmax.f32 %v853, 0.0
    %v862 = vsel %vm210, %v856, 0.0
    %v863 = vsel %vm211, %v857, 0.0
    %v864 = vsel %vm212, %v858, 0.0
    %v865 = vsel %vm213, %v859, 0.0
    %v866 = vsel %vm214, %v860, 0.0
    %v867 = vsel %vm215, %v861, 0.0
    %868 = vst [vmem:[#allocation3 + $0x1] sm:$0xff] %v862
    %869 = vst [vmem:[#allocation3 + $0x9] sm:$0xff] %v863
    %870 = vst [vmem:[#allocation3 + $0x11] sm:$0xff] %v864
    %871 = vst [vmem:[#allocation3 + $0x19] sm:$0xff] %v865
    %872 = vst [vmem:[#allocation3 + $0x21] sm:$0xff] %v866
    %873 = vst [vmem:[#allocation3 + $0x29] sm:$0xff] %v867
    %v874 = vld [vmem:[#allocation3] sm:$0xff]
    %v875 = vld [vmem:[#allocation3 + $0x8] sm:$0xff]
    %v876 = vld [vmem:[#allocation3 + $0x10] sm:$0xff]
    %v877 = vld [vmem:[#allocation3 + $0x18] sm:$0xff]
    %v878 = vld [vmem:[#allocation3 + $0x20] sm:$0xff]
    %v879 = vld [vmem:[#allocation3 + $0x28] sm:$0xff]
    %v880 = vld [vmem:[#allocation3 + $0x30] sm:$0xff]
    %v888 = vrot.slane %v874, 1
    %v889 = vrot.slane %v875, 1
    %v890 = vsel %vm407, %v888, %v889
    %v891 = vrot.slane %v876, 1
    %v892 = vsel %vm407, %v889, %v891
    %v893 = vrot.slane %v877, 1
    %v894 = vsel %vm407, %v891, %v893
    %v895 = vrot.slane %v878, 1
    %v896 = vsel %vm407, %v893, %v895
    %v897 = vrot.slane %v879, 1
    %v898 = vsel %vm407, %v895, %v897
    %v899 = vrot.slane %v880, 1
    %v900 = vsel %vm407, %v897, %v899
    %v907 = vrot.slane %v874, 2
    %v908 = vrot.slane %v875, 2
    %v909 = vsel %vm427, %v907, %v908
    %v910 = vrot.slane %v876, 2
    %v911 = vsel %vm427, %v908, %v910
    %v912 = vrot.slane %v877, 2
    %v913 = vsel %vm427, %v910, %v912
    %v914 = vrot.slane %v878, 2
    %v915 = vsel %vm427, %v912, %v914
    %v916 = vrot.slane %v879, 2
    %v917 = vsel %vm427, %v914, %v916
    %v918 = vrot.slane %v880, 2
    %v919 = vsel %vm427, %v916, %v918
    %v926 = vrot.slane %v874, 3
    %v927 = vrot.slane %v875, 3
    %v928 = vsel %vm447, %v926, %v927
    %v929 = vrot.slane %v876, 3
    %v930 = vsel %vm447, %v927, %v929
    %v931 = vrot.slane %v877, 3
    %v932 = vsel %vm447, %v929, %v931
    %v933 = vrot.slane %v878, 3
    %v934 = vsel %vm447, %v931, %v933
    %v935 = vrot.slane %v879, 3
    %v936 = vsel %vm447, %v933, %v935
    %v937 = vrot.slane %v880, 3
    %v938 = vsel %vm447, %v935, %v937
    %vm945 = vcmask 1043456
    %v946 = vrot.slane %v874, 4
    %v947 = vrot.slane %v875, 4
    %v948 = vsel %vm945, %v946, %v947
    %v949 = vrot.slane %v876, 4
    %v950 = vsel %vm945, %v947, %v949
    %v951 = vrot.slane %v877, 4
    %v952 = vsel %vm945, %v949, %v951
    %v953 = vrot.slane %v878, 4
    %v954 = vsel %vm945, %v951, %v953
    %v955 = vrot.slane %v879, 4
    %v956 = vsel %vm945, %v953, %v955
    %v957 = vrot.slane %v880, 4
    %v958 = vsel %vm945, %v955, %v957
    %v965 = vpack.c.bf16 %v875, %v874
    %v966 = vpack.c.bf16 %v892, %v890
    %v967 = vpack.c.bf16 %v911, %v909
    %v968 = vpack.c.bf16 %v930, %v928
    %v969 = vpack.c.bf16 %v950, %v948
    %v970 = vpack.c.bf16 %v877, %v876
    %v971 = vpack.c.bf16 %v896, %v894
    %v972 = vpack.c.bf16 %v915, %v913
    %v973 = vpack.c.bf16 %v934, %v932
    %v974 = vpack.c.bf16 %v954, %v952
    %v975 = vpack.c.bf16 %v879, %v878
    %v976 = vpack.c.bf16 %v900, %v898
    %v977 = vpack.c.bf16 %v919, %v917
    %v978 = vpack.c.bf16 %v938, %v936
    %v979 = vpack.c.bf16 %v958, %v956
    %v980 = vld [vmem:[#allocation10] sm:$0xf]
    %v981 = vld [vmem:[#allocation10 + $0x4] sm:$0xf]
    %v982 = vld [vmem:[#allocation10 + $0x8] sm:$0xf]
    %v983 = vld [vmem:[#allocation10 + $0xc] sm:$0xf]
    %v984 = vld [vmem:[#allocation10 + $0x10] sm:$0xf]
    %v985 = vld [vmem:[#allocation10 + $0x14] sm:$0xf]
    %v986 = vld [vmem:[#allocation10 + $0x18] sm:$0xf]
    %v987 = vld [vmem:[#allocation10 + $0x1c] sm:$0xf]
    %v988 = vld [vmem:[#allocation10 + $0x20] sm:$0xf]
    %v989 = vld [vmem:[#allocation10 + $0x24] sm:$0xf]
    %v990 = vld [vmem:[#allocation10 + $0x28] sm:$0xf]
    %v991 = vld [vmem:[#allocation10 + $0x2c] sm:$0xf]
    %v992 = vld [vmem:[#allocation10 + $0x30] sm:$0xf]
    %v993 = vld [vmem:[#allocation10 + $0x34] sm:$0xf]
    %v994 = vld [vmem:[#allocation10 + $0x38] sm:$0xf]
    %v995 = vld [vmem:[#allocation10 + $0x3c] sm:$0xf]
    %v996 = vld [vmem:[#allocation10 + $0x40] sm:$0xf]
    %v997 = vld [vmem:[#allocation10 + $0x44] sm:$0xf]
    %v998 = vld [vmem:[#allocation10 + $0x48] sm:$0xf]
    %v999 = vld [vmem:[#allocation10 + $0x4c] sm:$0xf]
    %v1000 = vld [vmem:[#allocation10 + $0x50] sm:$0xf]
    %v1001 = vld [vmem:[#allocation10 + $0x54] sm:$0xf]
    %v1002 = vld [vmem:[#allocation10 + $0x58] sm:$0xf]
    %v1003 = vld [vmem:[#allocation10 + $0x5c] sm:$0xf]
    %v1004 = vld [vmem:[#allocation10 + $0x60] sm:$0xf]
    %v1005 = vld [vmem:[#allocation10 + $0x64] sm:$0xf]
    %v1006 = vld [vmem:[#allocation10 + $0x68] sm:$0xf]
    %v1007 = vld [vmem:[#allocation10 + $0x6c] sm:$0xf]
    %v1008 = vld [vmem:[#allocation10 + $0x70] sm:$0xf]
    %v1009 = vld [vmem:[#allocation10 + $0x74] sm:$0xf]
    %v1010 = vld [vmem:[#allocation10 + $0x78] sm:$0xf]
    %v1011 = vld [vmem:[#allocation10 + $0x7c] sm:$0xf]
    %v1012 = vld [vmem:[#allocation10 + $0x80] sm:$0xf]
    %v1013 = vld [vmem:[#allocation10 + $0x84] sm:$0xf]
    %v1014 = vld [vmem:[#allocation10 + $0x88] sm:$0xf]
    %v1015 = vld [vmem:[#allocation10 + $0x8c] sm:$0xf]
    %v1016 = vld [vmem:[#allocation10 + $0x90] sm:$0xf]
    %v1017 = vld [vmem:[#allocation10 + $0x94] sm:$0xf]
    %v1018 = vld [vmem:[#allocation10 + $0x98] sm:$0xf]
    %v1019 = vld [vmem:[#allocation10 + $0x9c] sm:$0xf]
    %v1020 = vld [vmem:[#allocation10 + $0xa0] sm:$0xf]
    %v1021 = vld [vmem:[#allocation10 + $0xa4] sm:$0xf]
    %v1022 = vld [vmem:[#allocation10 + $0xa8] sm:$0xf]
    %v1023 = vld [vmem:[#allocation10 + $0xac] sm:$0xf]
    %v1024 = vld [vmem:[#allocation10 + $0xb0] sm:$0xf]
    %v1025 = vld [vmem:[#allocation10 + $0xb4] sm:$0xf]
    %v1026 = vld [vmem:[#allocation10 + $0xb8] sm:$0xf]
    %v1027 = vld [vmem:[#allocation10 + $0xbc] sm:$0xf]
    %v1028 = vld [vmem:[#allocation10 + $0xc0] sm:$0xf]
    %v1029 = vld [vmem:[#allocation10 + $0xc4] sm:$0xf]
    %v1030 = vld [vmem:[#allocation10 + $0xc8] sm:$0xf]
    %v1031 = vld [vmem:[#allocation10 + $0xcc] sm:$0xf]
    %v1032 = vld [vmem:[#allocation10 + $0xd0] sm:$0xf]
    %v1033 = vld [vmem:[#allocation10 + $0xd4] sm:$0xf]
    %v1034 = vld [vmem:[#allocation10 + $0xd8] sm:$0xf]
    %v1035 = vld [vmem:[#allocation10 + $0xdc] sm:$0xf]
    %v1036 = vld [vmem:[#allocation10 + $0xe0] sm:$0xf]
    %v1037 = vld [vmem:[#allocation10 + $0xe4] sm:$0xf]
    %v1038 = vld [vmem:[#allocation10 + $0xe8] sm:$0xf]
    %v1039 = vld [vmem:[#allocation10 + $0xec] sm:$0xf]
    %v1040 = vld [vmem:[#allocation10 + $0xf0] sm:$0xf]
    %v1041 = vld [vmem:[#allocation10 + $0xf4] sm:$0xf]
    %v1042 = vld [vmem:[#allocation10 + $0xf8] sm:$0xf]
    %v1043 = vld [vmem:[#allocation10 + $0xfc] sm:$0xf]
    %v1044 = vld [vmem:[#allocation10 + $0x100] sm:$0xf]
    %v1045 = vld [vmem:[#allocation10 + $0x104] sm:$0xf]
    %v1046 = vld [vmem:[#allocation10 + $0x108] sm:$0xf]
    %v1047 = vld [vmem:[#allocation10 + $0x10c] sm:$0xf]
    %v1048 = vld [vmem:[#allocation10 + $0x110] sm:$0xf]
    %v1049 = vld [vmem:[#allocation10 + $0x114] sm:$0xf]
    %v1050 = vld [vmem:[#allocation10 + $0x118] sm:$0xf]
    %v1051 = vld [vmem:[#allocation10 + $0x11c] sm:$0xf]
    %v1052 = vld [vmem:[#allocation10 + $0x120] sm:$0xf]
    %v1053 = vld [vmem:[#allocation10 + $0x124] sm:$0xf]
    %v1054 = vld [vmem:[#allocation10 + $0x128] sm:$0xf]
    %v1055 = vld [vmem:[#allocation10 + $0x12c] sm:$0xf]
    %v1056 = vld [vmem:[#allocation10 + $0x130] sm:$0xf]
    %v1057 = vld [vmem:[#allocation10 + $0x134] sm:$0xf]
    %v1058 = vld [vmem:[#allocation10 + $0x138] sm:$0xf]
    %v1059 = vld [vmem:[#allocation10 + $0x13c] sm:$0xf]
    %v1060 = vld [vmem:[%s6] sm:$0x1]
    %v1062 = vlaneseq
    %v1063 = vshrl.u32 %v1062, 7
    %v1064 = vsub.s32 0, %v1063
    %v1065 = vrot.slane %v1060, %v1064
    %v1147 = vunpack.c.l.b16 %v980
    %v1148 = vunpack.c.l.b16 %v981
    %v1149 = vunpack.c.l.b16 %v982
    %v1150 = vunpack.c.l.b16 %v983
    %v1151 = vunpack.c.l.b16 %v984
    %v1152 = vunpack.c.l.b16 %v985
    %v1153 = vunpack.c.l.b16 %v986
    %v1154 = vunpack.c.l.b16 %v987
    %v1155 = vunpack.c.l.b16 %v988
    %v1156 = vunpack.c.l.b16 %v989
    %v1157 = vunpack.c.l.b16 %v990
    %v1158 = vunpack.c.l.b16 %v991
    %v1159 = vunpack.c.l.b16 %v992
    %v1160 = vunpack.c.l.b16 %v993
    %v1161 = vunpack.c.l.b16 %v994
    %v1162 = vunpack.c.l.b16 %v995
    %v1163 = vunpack.c.l.b16 %v996
    %v1164 = vunpack.c.l.b16 %v997
    %v1165 = vunpack.c.l.b16 %v998
    %v1166 = vunpack.c.l.b16 %v999
    %v1167 = vunpack.c.l.b16 %v1000
    %v1168 = vunpack.c.l.b16 %v1001
    %v1169 = vunpack.c.l.b16 %v1002
    %v1170 = vunpack.c.l.b16 %v1003
    %v1171 = vunpack.c.l.b16 %v1004
    %v1172 = vunpack.c.l.b16 %v1005
    %v1173 = vunpack.c.l.b16 %v1006
    %v1174 = vunpack.c.l.b16 %v1007
    %v1175 = vunpack.c.l.b16 %v1008
    %v1176 = vunpack.c.l.b16 %v1009
    %v1177 = vunpack.c.l.b16 %v1010
    %v1178 = vunpack.c.l.b16 %v1011
    %v1179 = vunpack.c.l.b16 %v1012
    %v1180 = vunpack.c.l.b16 %v1013
    %v1181 = vunpack.c.l.b16 %v1014
    %v1182 = vunpack.c.l.b16 %v1015
    %v1183 = vunpack.c.l.b16 %v1016
    %v1184 = vunpack.c.l.b16 %v1017
    %v1185 = vunpack.c.l.b16 %v1018
    %v1186 = vunpack.c.l.b16 %v1019
    %v1187 = vunpack.c.l.b16 %v1020
    %v1188 = vunpack.c.l.b16 %v1021
    %v1189 = vunpack.c.l.b16 %v1022
    %v1190 = vunpack.c.l.b16 %v1023
    %v1191 = vunpack.c.l.b16 %v1024
    %v1192 = vunpack.c.l.b16 %v1025
    %v1193 = vunpack.c.l.b16 %v1026
    %v1194 = vunpack.c.l.b16 %v1027
    %v1195 = vunpack.c.l.b16 %v1028
    %v1196 = vunpack.c.l.b16 %v1029
    %v1197 = vunpack.c.l.b16 %v1030
    %v1198 = vunpack.c.l.b16 %v1031
    %v1199 = vunpack.c.l.b16 %v1032
    %v1200 = vunpack.c.l.b16 %v1033
    %v1201 = vunpack.c.l.b16 %v1034
    %v1202 = vunpack.c.l.b16 %v1035
    %v1203 = vunpack.c.l.b16 %v1036
    %v1204 = vunpack.c.l.b16 %v1037
    %v1205 = vunpack.c.l.b16 %v1038
    %v1206 = vunpack.c.l.b16 %v1039
    %v1207 = vunpack.c.l.b16 %v1040
    %v1208 = vunpack.c.l.b16 %v1041
    %v1209 = vunpack.c.l.b16 %v1042
    %v1210 = vunpack.c.l.b16 %v1043
    %v1211 = vunpack.c.l.b16 %v1044
    %v1212 = vunpack.c.l.b16 %v1045
    %v1213 = vunpack.c.l.b16 %v1046
    %v1214 = vunpack.c.l.b16 %v1047
    %v1215 = vunpack.c.l.b16 %v1048
    %v1216 = vunpack.c.l.b16 %v1049
    %v1217 = vunpack.c.l.b16 %v1050
    %v1218 = vunpack.c.l.b16 %v1051
    %v1219 = vunpack.c.l.b16 %v1052
    %v1220 = vunpack.c.l.b16 %v1053
    %v1221 = vunpack.c.l.b16 %v1054
    %v1222 = vunpack.c.l.b16 %v1055
    %v1223 = vunpack.c.l.b16 %v1056
    %v1224 = vunpack.c.l.b16 %v1057
    %v1225 = vunpack.c.l.b16 %v1058
    %v1226 = vunpack.c.l.b16 %v1059
    %v1227 = vpack.c.b16 %v1148, %v1147
    %v1228 = vpack.c.b16 %v1150, %v1149
    %v1229 = vpack.c.b16 %v1152, %v1151
    %v1230 = vpack.c.b16 %v1154, %v1153
    %v1231 = vpack.c.b16 %v1156, %v1155
    %v1232 = vpack.c.b16 %v1158, %v1157
    %v1233 = vpack.c.b16 %v1160, %v1159
    %v1234 = vpack.c.b16 %v1162, %v1161
    %v1235 = vpack.c.b16 %v1164, %v1163
    %v1236 = vpack.c.b16 %v1166, %v1165
    %v1237 = vpack.c.b16 %v1168, %v1167
    %v1238 = vpack.c.b16 %v1170, %v1169
    %v1239 = vpack.c.b16 %v1172, %v1171
    %v1240 = vpack.c.b16 %v1174, %v1173
    %v1241 = vpack.c.b16 %v1176, %v1175
    %v1242 = vpack.c.b16 %v1178, %v1177
    %v1243 = vpack.c.b16 %v1180, %v1179
    %v1244 = vpack.c.b16 %v1182, %v1181
    %v1245 = vpack.c.b16 %v1184, %v1183
    %v1246 = vpack.c.b16 %v1186, %v1185
    %v1247 = vpack.c.b16 %v1188, %v1187
    %v1248 = vpack.c.b16 %v1190, %v1189
    %v1249 = vpack.c.b16 %v1192, %v1191
    %v1250 = vpack.c.b16 %v1194, %v1193
    %v1251 = vpack.c.b16 %v1196, %v1195
    %v1252 = vpack.c.b16 %v1198, %v1197
    %v1253 = vpack.c.b16 %v1200, %v1199
    %v1254 = vpack.c.b16 %v1202, %v1201
    %v1255 = vpack.c.b16 %v1204, %v1203
    %v1256 = vpack.c.b16 %v1206, %v1205
    %v1257 = vpack.c.b16 %v1208, %v1207
    %v1258 = vpack.c.b16 %v1210, %v1209
    %v1259 = vpack.c.b16 %v1212, %v1211
    %v1260 = vpack.c.b16 %v1214, %v1213
    %v1261 = vpack.c.b16 %v1216, %v1215
    %v1262 = vpack.c.b16 %v1218, %v1217
    %v1263 = vpack.c.b16 %v1220, %v1219
    %v1264 = vpack.c.b16 %v1222, %v1221
    %v1265 = vpack.c.b16 %v1224, %v1223
    %v1266 = vpack.c.b16 %v1226, %v1225
    %1307 = vmatprep.subr.bf16.mxu0 0
    %1308 = vmatpush1.bf16.msra.mxu0 %v1227
    %1309 = vmatprep.subr.bf16.mxu0 0
    %1310 = vmatpush1.bf16.msra.mxu0 %v1228
    %1311 = vmatprep.subr.bf16.mxu0 0
    %1312 = vmatpush1.bf16.msra.mxu0 %v1229
    %1313 = vmatprep.subr.bf16.mxu0 0
    %1314 = vmatpush1.bf16.msra.mxu0 %v1230
    %1315 = vmatprep.subr.bf16.mxu0 0
    %1316 = vmatpush1.bf16.msra.mxu0 %v1231
    %1317 = vmatprep.subr.bf16.mxu0 0
    %1318 = vmatpush1.bf16.msra.mxu0 %v1232
    %1319 = vmatprep.subr.bf16.mxu0 0
    %1320 = vmatpush1.bf16.msra.mxu0 %v1233
    %1321 = vmatprep.subr.bf16.mxu0 0
    %1322 = vmatpush1.bf16.msra.mxu0 %v1234
    %1323 = vmatprep.subr.bf16.mxu0 0
    %1324 = vmatpush1.bf16.msra.mxu0 %v1235
    %1325 = vmatprep.subr.bf16.mxu0 0
    %1326 = vmatpush1.bf16.msra.mxu0 %v1236
    %1327 = vmatprep.subr.bf16.mxu0 0
    %1328 = vmatpush1.bf16.msra.mxu0 %v1237
    %1329 = vmatprep.subr.bf16.mxu0 0
    %1330 = vmatpush1.bf16.msra.mxu0 %v1238
    %1331 = vmatprep.subr.bf16.mxu0 0
    %1332 = vmatpush1.bf16.msra.mxu0 %v1239
    %1333 = vmatprep.subr.bf16.mxu0 0
    %1334 = vmatpush1.bf16.msra.mxu0 %v1240
    %1335 = vmatprep.subr.bf16.mxu0 0
    %1336 = vmatpush1.bf16.msra.mxu0 %v1241
    %1337 = vmatprep.subr.bf16.mxu0 0
    %1338 = vmatpush1.bf16.msra.mxu0 %v1242
    %1339 = vmatprep.mubr.bf16.mxu0 %v966
    %1340 = vmatmul.mubr.bf16.gmra.mrb[0].mxu0 %v965
    %v1341 = vpop.f32.mrb[0].mxu0
    %v1342 = vadd.f32 %v1065, %v1341
    %v1343 = vpop.f32.mrb[0].mxu0
    %v1344 = vpop.f32.mrb[0].mxu0
    %v1345 = vadd.f32 %v1065, %v1344
    %v1346 = vpop.f32.mrb[0].mxu0
    %1347 = vmatprep.mubr.bf16.mxu0 %v971
    %1348 = vmatmul.mubr.bf16.gmra.mrb[0].mxu0 %v970
    %v1349 = vpop.f32.mrb[0].mxu0
    %v1350 = vadd.f32 %v1065, %v1349
    %v1351 = vpop.f32.mrb[0].mxu0
    %v1352 = vpop.f32.mrb[0].mxu0
    %v1353 = vadd.f32 %v1065, %v1352
    %v1354 = vpop.f32.mrb[0].mxu0
    %1355 = vmatprep.mubr.bf16.mxu0 %v976
    %1356 = vmatmul.mubr.bf16.gmra.mrb[0].mxu0 %v975
    %v1357 = vpop.f32.mrb[0].mxu0
    %v1358 = vadd.f32 %v1065, %v1357
    %v1359 = vpop.f32.mrb[0].mxu0
    %v1360 = vpop.f32.mrb[0].mxu0
    %v1361 = vadd.f32 %v1065, %v1360
    %v1362 = vpop.f32.mrb[0].mxu0
    %1363 = vdwg.mxu0
    %1364 = vmatprep.subr.bf16.mxu0 0
    %1365 = vmatpush1.bf16.msra.mxu0 %v1243
    %1366 = vmatprep.subr.bf16.mxu0 0
    %1367 = vmatpush1.bf16.msra.mxu0 %v1244
    %1368 = vmatprep.subr.bf16.mxu0 0
    %1369 = vmatpush1.bf16.msra.mxu0 %v1245
    %1370 = vmatprep.subr.bf16.mxu0 0
    %1371 = vmatpush1.bf16.msra.mxu0 %v1246
    %1372 = vmatprep.subr.bf16.mxu0 0
    %1373 = vmatpush1.bf16.msra.mxu0 %v1247
    %1374 = vmatprep.subr.bf16.mxu0 0
    %1375 = vmatpush1.bf16.msra.mxu0 %v1248
    %1376 = vmatprep.subr.bf16.mxu0 0
    %1377 = vmatpush1.bf16.msra.mxu0 %v1249
    %1378 = vmatprep.subr.bf16.mxu0 0
    %1379 = vmatpush1.bf16.msra.mxu0 %v1250
    %1380 = vmatprep.subr.bf16.mxu0 0
    %1381 = vmatpush1.bf16.msra.mxu0 %v1251
    %1382 = vmatprep.subr.bf16.mxu0 0
    %1383 = vmatpush1.bf16.msra.mxu0 %v1252
    %1384 = vmatprep.subr.bf16.mxu0 0
    %1385 = vmatpush1.bf16.msra.mxu0 %v1253
    %1386 = vmatprep.subr.bf16.mxu0 0
    %1387 = vmatpush1.bf16.msra.mxu0 %v1254
    %1388 = vmatprep.subr.bf16.mxu0 0
    %1389 = vmatpush1.bf16.msra.mxu0 %v1255
    %1390 = vmatprep.subr.bf16.mxu0 0
    %1391 = vmatpush1.bf16.msra.mxu0 %v1256
    %1392 = vmatprep.subr.bf16.mxu0 0
    %1393 = vmatpush1.bf16.msra.mxu0 %v1257
    %1394 = vmatprep.subr.bf16.mxu0 0
    %1395 = vmatpush1.bf16.msra.mxu0 %v1258
    %1396 = vmatprep.mubr.bf16.mxu0 %v968
    %1397 = vmatmul.mubr.bf16.gmra.mrb[0].mxu0 %v967
    %v1398 = vpop.f32.mrb[0].mxu0
    %v1399 = vadd.f32 %v1342, %v1398
    %v1400 = vpop.f32.mrb[0].mxu0
    %v1401 = vpop.f32.mrb[0].mxu0
    %v1402 = vadd.f32 %v1345, %v1401
    %v1403 = vpop.f32.mrb[0].mxu0
    %1404 = vmatprep.mubr.bf16.mxu0 %v973
    %1405 = vmatmul.mubr.bf16.gmra.mrb[0].mxu0 %v972
    %v1406 = vpop.f32.mrb[0].mxu0
    %v1407 = vadd.f32 %v1350, %v1406
    %v1408 = vpop.f32.mrb[0].mxu0
    %v1409 = vpop.f32.mrb[0].mxu0
    %v1410 = vadd.f32 %v1353, %v1409
    %v1411 = vpop.f32.mrb[0].mxu0
    %1412 = vmatprep.mubr.bf16.mxu0 %v978
    %1413 = vmatmul.mubr.bf16.gmra.mrb[0].mxu0 %v977
    %v1414 = vpop.f32.mrb[0].mxu0
    %v1415 = vadd.f32 %v1358, %v1414
    %v1416 = vpop.f32.mrb[0].mxu0
    %v1417 = vpop.f32.mrb[0].mxu0
    %v1418 = vadd.f32 %v1361, %v1417
    %v1419 = vpop.f32.mrb[0].mxu0
    %1420 = vdwg.mxu0
    %1421 = vmatprep.subr.bf16.mxu0 0
    %1422 = vmatpush1.bf16.msra.mxu0 %v1259
    %1423 = vmatprep.subr.bf16.mxu0 0
    %1424 = vmatpush1.bf16.msra.mxu0 %v1260
    %1425 = vmatprep.subr.bf16.mxu0 0
    %1426 = vmatpush1.bf16.msra.mxu0 %v1261
    %1427 = vmatprep.subr.bf16.mxu0 0
    %1428 = vmatpush1.bf16.msra.mxu0 %v1262
    %1429 = vmatprep.subr.bf16.mxu0 0
    %1430 = vmatpush1.bf16.msra.mxu0 %v1263
    %1431 = vmatprep.subr.bf16.mxu0 0
    %1432 = vmatpush1.bf16.msra.mxu0 %v1264
    %1433 = vmatprep.subr.bf16.mxu0 0
    %1434 = vmatpush1.bf16.msra.mxu0 %v1265
    %1435 = vmatprep.subr.bf16.mxu0 0
    %1436 = vmatpush1.bf16.msra.mxu0 %v1266
    %1437 = vmatprep.subr.bf16.mxu0 0
    %1438 = vmatpush1.bf16.msra.mxu0 0
    %1439 = vmatprep.subr.bf16.mxu0 0
    %1440 = vmatpush1.bf16.msra.mxu0 0
    %1441 = vmatprep.subr.bf16.mxu0 0
    %1442 = vmatpush1.bf16.msra.mxu0 0
    %1443 = vmatprep.subr.bf16.mxu0 0
    %1444 = vmatpush1.bf16.msra.mxu0 0
    %1445 = vmatprep.subr.bf16.mxu0 0
    %1446 = vmatpush1.bf16.msra.mxu0 0
    %1447 = vmatprep.subr.bf16.mxu0 0
    %1448 = vmatpush1.bf16.msra.mxu0 0
    %1449 = vmatprep.subr.bf16.mxu0 0
    %1450 = vmatpush1.bf16.msra.mxu0 0
    %1451 = vmatprep.subr.bf16.mxu0 0
    %1452 = vmatpush1.bf16.msra.mxu0 0
    %1453 = vmatprep.mubr.bf16.mxu0 0
    %1454 = vmatmul.mubr.bf16.gmra.mrb[0].mxu0 %v969
    %v1455 = vpop.f32.mrb[0].mxu0
    %v1456 = vadd.f32 %v1399, %v1455
    %v1457 = vpop.f32.mrb[0].mxu0
    %v1458 = vpop.f32.mrb[0].mxu0
    %v1459 = vadd.f32 %v1402, %v1458
    %v1460 = vpop.f32.mrb[0].mxu0
    %1461 = vmatprep.mubr.bf16.mxu0 0
    %1462 = vmatmul.mubr.bf16.gmra.mrb[0].mxu0 %v974
    %v1463 = vpop.f32.mrb[0].mxu0
    %v1464 = vadd.f32 %v1407, %v1463
    %v1465 = vpop.f32.mrb[0].mxu0
    %v1466 = vpop.f32.mrb[0].mxu0
    %v1467 = vadd.f32 %v1410, %v1466
    %v1468 = vpop.f32.mrb[0].mxu0
    %1469 = vmatprep.mubr.bf16.mxu0 0
    %1470 = vmatmul.mubr.bf16.gmra.mrb[0].mxu0 %v979
    %v1471 = vpop.f32.mrb[0].mxu0
    %v1472 = vadd.f32 %v1415, %v1471
    %v1473 = vpop.f32.mrb[0].mxu0
    %v1474 = vpop.f32.mrb[0].mxu0
    %v1475 = vadd.f32 %v1418, %v1474
    %v1476 = vpop.f32.mrb[0].mxu0
    %1477 = vdwg.mxu0
    %v1478 = vmax.f32 %v1456, 0.0
    %v1479 = vmax.f32 %v1459, 0.0
    %v1480 = vmax.f32 %v1464, 0.0
    %v1481 = vmax.f32 %v1467, 0.0
    %v1482 = vmax.f32 %v1472, 0.0
    %v1483 = vmax.f32 %v1475, 0.0
    %v1484 = vsel %vm222, %v1478, 0.0
    %v1485 = vsel %vm223, %v1479, 0.0
    %v1486 = vsel %vm224, %v1480, 0.0
    %v1487 = vsel %vm225, %v1481, 0.0
    %v1488 = vsel %vm226, %v1482, 0.0
    %v1489 = vsel %vm227, %v1483, 0.0
    %v1490 = vmax.f32 %v1484, %v1485
    %v1491 = vmax.f32 %v1490, %v1486
    %v1492 = vrot.slane %v1491, 4
    %v1493 = vmax.f32 %v1491, %v1492
    %v1494 = vrot.slane %v1493, 2
    %v1495 = vmax.f32 %v1493, %v1494
    %v1496 = vrot.slane %v1495, 1
    %v1497 = vmax.f32 %v1495, %v1496
    %1498 = vst [vmem:[#allocation12] sm:$0x1] %v1497
    %v1499 = vmax.f32 %v1487, %v1488
    %v1500 = vmax.f32 %v1499, %v1489
    %v1501 = vrot.slane %v1500, 4
    %v1502 = vmax.f32 %v1500, %v1501
    %v1503 = vrot.slane %v1502, 2
    %v1504 = vmax.f32 %v1502, %v1503
    %v1505 = vrot.slane %v1504, 1
    %v1506 = vmax.f32 %v1504, %v1505
    %1507 = vst [vmem:[#allocation12 + $0x1] sm:$0x1] %v1506
    // Predicated region
    $region46: #{tpu_custom_call.1} parent=1 // pred_check
      _
    $region47: #{tpu_custom_call.1} parent=1 // pred_check_branch
      %1509 = sbr.rel (0) target = $region49
    $region48: #{tpu_custom_call.1} parent=1 // pred_region
      %s1511 = ssub.s32 32, 32
      %1512 = vsyncadd [#allocation6], %s1511
      %s1514 = sshll.u32 [#allocation12], 4
      %s1515 = int_to_ptr.vmem [resolvable:$true] %s1514
      %1517 = dma.vmem_to_hbm [thread:$0]  %s1515, 32, %s7, [#allocation6]
    $region49: #{tpu_custom_call.1} parent=1 // pred_fallthru
      _
    // Predicated region
    $region50: #{tpu_custom_call.1} parent=1 // pred_check
      _
    $region51: #{tpu_custom_call.1} parent=1 // pred_check_branch
      %1519 = sbr.rel (0) target = $region53
    $region52: #{tpu_custom_call.1} parent=1 // pred_region
      %1520 = dma.done [#allocation6], 32
    $region53: #{tpu_custom_call.1} parent=1 // pred_fallthru
      _
    %1521 = vsyncpa [#allocation5], 1
    %1522 = vsyncpa [#allocation8], 1
    %1523 = vsyncpa [#allocation11], 1
    %1524 = vsyncpa [#allocation6], 1

</llo_original>
